<compile_context>
chip_gen: v5e
topology: v5e:2x2
jax: 0.10.0
libtpu: 0.0.40
codegen_flags: <defaults>
</compile_context>

<pallas_src>
import math
import functools

import jax
import jax.numpy as jnp
from jax.experimental import pallas as pl
from jax.experimental.pallas import tpu as pltpu


# ---------------------------------------------------------------------------
# In-kernel helpers (element-wise math stays in f32)
# ---------------------------------------------------------------------------
def _layernorm(x, w, b, eps=1e-5):
    mu = jnp.mean(x, axis=-1, keepdims=True)
    var = jnp.mean((x - mu) ** 2, axis=-1, keepdims=True)
    return (x - mu) * jax.lax.rsqrt(var + eps) * w + b


def _gelu_exact(x):
    # PyTorch nn.GELU() default (erf form).
    return 0.5 * x * (1.0 + jax.lax.erf(x * (1.0 / math.sqrt(2.0))))


# ---------------------------------------------------------------------------
# Pallas kernel: one (batch, query-tile) grid step of the decoder layer
# ---------------------------------------------------------------------------
def decoder_layer_kernel(
    # inputs
    x_ref,                  # (1, S, D)  f32  full sequence for this batch element
    pe_ref,                 # (S, hd)    f32  additive per-head PE table
    ln1_w_ref, ln1_b_ref,   # (1, D)
    wq_ref, bq_ref,         # (D, D)  mm_dtype, (1, D)  f32
    wkv_ref, bkv_ref,       # (D, 2D) mm_dtype, (1, 2D) f32
    wo_ref, bo_ref,         # (D, D)  mm_dtype, (1, D)  f32
    ln2_w_ref, ln2_b_ref,   # (1, D)
    w1_ref, b1_ref,         # (D, 4D) mm_dtype (pre-folded), (1, 4D) f32
    w2_ref, b2_ref,         # (4D, D) mm_dtype, (1, D) f32
    ln3_w_ref, ln3_b_ref,   # (1, D)
    # output
    out_ref,                # (1, tq, D)
    # scratch (persists across the query-tile grid axis)
    k_scr, v_scr,           # (H, S, head_dim) mm_dtype
    *, num_heads, head_dim, tq, kt,
):
    H = num_heads
    D = H * head_dim
    S = x_ref.shape[1]
    qi = pl.program_id(1)
    mm = wq_ref.dtype
    exact = mm == jnp.float32          # f32 parity path vs bf16 perf path
    scale = head_dim ** (-0.5)
    n_kc = S // kt

    # ---- once per batch element: LN1 + K/V projection (+PE on K), head split ----
    @pl.when(qi == 0)
    def _():
        h = _layernorm(x_ref[0], ln1_w_ref[0], ln1_b_ref[0])                 # (S, D)
        kv = jnp.dot(h.astype(mm), wkv_ref[...],
                     preferred_element_type=jnp.float32) + bkv_ref[0]        # (S, 2D) f32
        k_stack = jnp.stack([kv[:, hh * head_dim:(hh + 1) * head_dim]
                             for hh in range(H)], axis=0)                    # (H, S, hd)
        v_stack = jnp.stack([kv[:, D + hh * head_dim:D + (hh + 1) * head_dim]
                             for hh in range(H)], axis=0)
        k_scr[...] = (k_stack + pe_ref[...]).astype(mm)                      # +PE per head
        v_scr[...] = v_stack.astype(mm)

    # ---- this query tile: LN1 + Q projection (+PE, 1/sqrt(hd) folded into q) ----
    q0 = pl.multiple_of(qi * tq, tq)
    x_t = x_ref[0, pl.ds(q0, tq), :]                                         # (tq, D) f32
    h_t = _layernorm(x_t, ln1_w_ref[0], ln1_b_ref[0])
    q = jnp.dot(h_t.astype(mm), wq_ref[...],
                preferred_element_type=jnp.float32) + bq_ref[0]              # (tq, D) f32
    qh = jnp.stack([q[:, hh * head_dim:(hh + 1) * head_dim]
                    for hh in range(H)], axis=0)                             # (H, tq, hd)
    qh = ((qh + pe_ref[pl.ds(q0, tq), :]) * scale).astype(mm)

    # ---- attention: K-chunked online softmax, normalize once after PV ----
    def kv_step(kc, carry):
        m, l, acc = carry
        start = kc * kt
        if not isinstance(start, int):
            start = pl.multiple_of(start, kt)
        kb = k_scr[:, pl.ds(start, kt), :]                                   # (H, kt, hd)
        vb = v_scr[:, pl.ds(start, kt), :]
        s = jnp.einsum("hqd,hkd->hqk", qh, kb,
                       preferred_element_type=jnp.float32)                   # (H, tq, kt) f32
        m_new = jnp.maximum(m, jnp.max(s, axis=-1, keepdims=True))
        alpha = jnp.exp(m - m_new)
        p = jnp.exp(s - m_new)
        l_new = alpha * l + jnp.sum(p, axis=-1, keepdims=True)
        acc_new = alpha * acc + jnp.einsum("hqk,hkd->hqd", p.astype(mm), vb,
                                           preferred_element_type=jnp.float32)
        return m_new, l_new, acc_new

    m0 = jnp.full((H, tq, 1), -jnp.inf, jnp.float32)
    l0 = jnp.zeros((H, tq, 1), jnp.float32)
    a0 = jnp.zeros((H, tq, head_dim), jnp.float32)
    if n_kc == 1:
        _, l, acc = kv_step(0, (m0, l0, a0))
    else:
        _, l, acc = jax.lax.fori_loop(0, n_kc, kv_step, (m0, l0, a0))

    if exact:
        o = acc / l                                   # keeps f32 parity with reference
    else:
        o = acc * pl.reciprocal(l, approx=True)       # free EUP slot on bf16 path

    # Output projection: concat heads back to lane-dense (tq, D), one full-depth MXU pass.
    attn = jnp.concatenate([o[hh] for hh in range(H)], axis=-1)              # (tq, D)
    attn = jnp.dot(attn.astype(mm), wo_ref[...],
                   preferred_element_type=jnp.float32) + bo_ref[0]

    x1 = x_t + attn

    # ---- FFN: cat([h2, h2]) @ W1 algebraically folded into h2 @ (W1[:D] + W1[D:]) ----
    h2 = _layernorm(x1, ln2_w_ref[0], ln2_b_ref[0])
    f = jnp.dot(h2.astype(mm), w1_ref[...],
                preferred_element_type=jnp.float32) + b1_ref[0]
    f = _gelu_exact(f) if exact else jax.nn.gelu(f, approximate=True)        # tanh -> EUP
    f = jnp.dot(f.astype(mm), w2_ref[...],
                preferred_element_type=jnp.float32) + b2_ref[0]

    x2 = x1 + f
    out_ref[0] = _layernorm(x2, ln3_w_ref[0], ln3_b_ref[0]).astype(out_ref.dtype)


# ---------------------------------------------------------------------------
# Wrapper
# ---------------------------------------------------------------------------
def enhanced_decoder_layer(x, params, pe, num_heads, *, q_tile=None, k_tile=None,
                           compute_dtype=jnp.bfloat16):
    """compute_dtype feeds the MXU / K-V scratch only; accumulation and all
    element-wise math stay f32. Use compute_dtype=jnp.float32 for exact parity."""
    B, S, D = x.shape
    assert D % num_heads == 0
    head_dim = D // num_heads

    def _fit_tile(t, default):
        t = default if t is None else t
        t = min(t, S)
        if S % t != 0 or (t % 8 != 0 and t != S):
            t = S                       # crude fallback: whole sequence as one tile
        return t

    q_tile = _fit_tile(q_tile, 256)
    k_tile = _fit_tile(k_tile, 512)
    n_qt = S // q_tile

    # ---- host-side weight prep: fuse K/V, fold W1 ----
    p = params
    mm = jnp.dtype(compute_dtype)
    wq = p["wq"].astype(mm)                                                   # (D, D)
    wkv = jnp.concatenate([p["wk"], p["wv"]], axis=1).astype(mm)              # (D, 2D)
    bkv = jnp.concatenate([p["bk"], p["bv"]], axis=1)                         # (1, 2D)
    w1f = (p["w1"][:D] + p["w1"][D:]).astype(mm)                              # (D, 4D)

    operands = (
        x, pe,
        p["ln1_w"], p["ln1_b"],
        wq, p["bq"],
        wkv, bkv,
        p["wo"].astype(mm), p["bo"],
        p["ln2_w"], p["ln2_b"],
        w1f, p["b1"],
        p["w2"].astype(mm), p["b2"],
        p["ln3_w"], p["ln3_b"],
    )

    kernel = functools.partial(decoder_layer_kernel, num_heads=num_heads,
                               head_dim=head_dim, tq=q_tile, kt=k_tile)

    # ---- VMEM budget: derive from hardware, keep headroom (v7x has only 64 MiB) ----
    try:
        phys = int(pltpu.get_tpu_info().vmem_capacity_bytes)
    except Exception:
        # hardware query unavailable on this backend -> conservative physical estimate
        phys = 64 * 1024 * 1024
    cap = int(phys * 0.85)

    const_bytes = sum(int(a.size) * a.dtype.itemsize for a in operands[1:])
    est = 2 * const_bytes                                       # consts (double-buffered)
    est += 2 * S * D * 4 + 2 * q_tile * D * 4                   # x block + out block
    est += 2 * num_heads * S * max(head_dim, 128) * mm.itemsize  # K/V scratch (lane pad)
    est += num_heads * q_tile * k_tile * 4                      # score / prob chunk
    est += q_tile * 4 * D * 4 + 4 * q_tile * D * 4              # FFN hidden + activations
    vmem_limit = int(min(cap, max(32 * 1024 * 1024, 2 * est)))

    in_specs = [pl.BlockSpec((1, S, D), lambda b, t: (b, 0, 0))]
    for a in operands[1:]:
        nd = a.ndim
        # constant index_map -> block is fetched once and stays resident
        in_specs.append(pl.BlockSpec(a.shape, lambda b, t, _n=nd: (0,) * _n))

    return pl.pallas_call(
        kernel,
        out_shape=jax.ShapeDtypeStruct((B, S, D), x.dtype),
        grid=(B, n_qt),
        in_specs=in_specs,
        out_specs=pl.BlockSpec((1, q_tile, D), lambda b, t: (b, t, 0)),
        scratch_shapes=[pltpu.VMEM((num_heads, S, head_dim), mm),
                        pltpu.VMEM((num_heads, S, head_dim), mm)],
        compiler_params=pltpu.CompilerParams(
            dimension_semantics=("parallel", "arbitrary"),
            vmem_limit_bytes=vmem_limit),
    )(*operands)


# ---------------------------------------------------------------------------
# Deterministic parameter construction
# ---------------------------------------------------------------------------
def make_params(key, d_model):
    D = d_model
    keys = jax.random.split(key, 12)

    def linear(k, fan_in, fan_out):
        bound = 1.0 / math.sqrt(fan_in)
        kw, kb = jax.random.split(k)
        w = jax.random.uniform(kw, (fan_in, fan_out), jnp.float32, -bound, bound)
        b = jax.random.uniform(kb, (1, fan_out), jnp.float32, -bound, bound)
        return w, b

    params = {}
    params["wq"], params["bq"] = linear(keys[0], D, D)
    params["wk"], params["bk"] = linear(keys[1], D, D)
    params["wv"], params["bv"] = linear(keys[2], D, D)
    params["wo"], params["bo"] = linear(keys[3], D, D)
    params["w1"], params["b1"] = linear(keys[4], 2 * D, 4 * D)
    params["w2"], params["b2"] = linear(keys[5], 4 * D, D)
    for name in ["ln1", "ln2", "ln3"]:
        params[f"{name}_w"] = jnp.ones((1, D), jnp.float32)
        params[f"{name}_b"] = jnp.zeros((1, D), jnp.float32)
    return params


def make_sinusoidal_pe(seq_len, head_dim):
    pos = jnp.arange(seq_len, dtype=jnp.float32)[:, None]
    div = jnp.exp(jnp.arange(0, head_dim, 2, dtype=jnp.float32)
                  * (-math.log(10000.0) / head_dim))
    pe = jnp.zeros((seq_len, head_dim), jnp.float32)
    pe = pe.at[:, 0::2].set(jnp.sin(pos * div))
    pe = pe.at[:, 1::2].set(jnp.cos(pos * div))
    return pe


# ---------------------------------------------------------------------------
# Pure-JAX reference (unfused / unfolded math, mirrors the PyTorch forward)
# ---------------------------------------------------------------------------
def reference(x, p, pe, num_heads):
    def ln(v, w, b):
        mu = v.mean(-1, keepdims=True)
        var = ((v - mu) ** 2).mean(-1, keepdims=True)
        return (v - mu) / jnp.sqrt(var + 1e-5) * w + b

    B, S, D = x.shape
    hd = D // num_heads
    h = ln(x, p["ln1_w"], p["ln1_b"])
    q = h @ p["wq"] + p["bq"]
    k = h @ p["wk"] + p["bk"]
    v = h @ p["wv"] + p["bv"]
    q = q.reshape(B, S, num_heads, hd).transpose(0, 2, 1, 3) + pe
    k = k.reshape(B, S, num_heads, hd).transpose(0, 2, 1, 3) + pe
    v = v.reshape(B, S, num_heads, hd).transpose(0, 2, 1, 3)
    s = jnp.einsum("bhqd,bhkd->bhqk", q, k) * hd ** -0.5
    a = jax.nn.softmax(s, axis=-1)
    o = jnp.einsum("bhqk,bhkd->bhqd", a, v).transpose(0, 2, 1, 3).reshape(B, S, D)
    o = o @ p["wo"] + p["bo"]
    x1 = x + o
    h2 = ln(x1, p["ln2_w"], p["ln2_b"])
    f = jnp.concatenate([h2, h2], -1) @ p["w1"] + p["b1"]
    f = jax.nn.gelu(f, approximate=False)
    f = f @ p["w2"] + p["b2"]
    x2 = x1 + f
    return ln(x2, p["ln3_w"], p["ln3_b"])


# ---------------------------------------------------------------------------
if __name__ == "__main__":
    def run_case(B, S, D, H, q_tile=None, k_tile=None):
        key = jax.random.PRNGKey(0)
        kx, kp = jax.random.split(key)
        x = jax.random.normal(kx, (B, S, D), jnp.float32)
        params = make_params(kp, D)
        pe = make_sinusoidal_pe(S, D // H)
        ref = reference(x, params, pe, H)

        # f32 path: parity with the PyTorch/f32 math (5e-4: scale folding, post-PV
        # normalization and online softmax change rounding order, not the math).
        out = jax.block_until_ready(enhanced_decoder_layer(
            x, params, pe, num_heads=H, q_tile=q_tile, k_tile=k_tile,
            compute_dtype=jnp.float32))
        assert out.shape == (B, S, D)
        err = float(jnp.max(jnp.abs(out - ref)))
        assert jnp.allclose(out, ref, atol=5e-4, rtol=5e-4), \
            f"f32 kernel mismatch vs reference (max abs err {err:.2e})"

        # bf16 MXU path (default perf configuration): f32 accumulation / element-wise.
        out_bf16 = jax.block_until_ready(enhanced_decoder_layer(
            x, params, pe, num_heads=H, q_tile=q_tile, k_tile=k_tile))
        assert out_bf16.shape == (B, S, D)
        assert bool(jnp.all(jnp.isfinite(out_bf16)))
        assert float(jnp.max(jnp.abs(out_bf16 - ref))) < 0.25, "bf16 kernel diverged"

    # small shapes consistent with the module (single query/key tile)
    run_case(2, 8, 32, 4)
    # exercises multi-query-tile pipelining + K-chunked online softmax (fori_loop path)
    run_case(1, 128, 64, 4, q_tile=32, k_tile=32)

    print("KERNEL_OK")
</pallas_src>

<mosaic_0001>
module attributes {stable_mosaic.version = 11 : i64} {
  func.func @decoder_layer_kernel(%arg0: i32, %arg1: i32, %arg2: memref<1x8x32xf32, #tpu.memory_space<vmem>>, %arg3: memref<8x8xf32, #tpu.memory_space<vmem>>, %arg4: memref<1x32xf32, #tpu.memory_space<vmem>>, %arg5: memref<1x32xf32, #tpu.memory_space<vmem>>, %arg6: memref<32x32xf32, #tpu.memory_space<vmem>>, %arg7: memref<1x32xf32, #tpu.memory_space<vmem>>, %arg8: memref<32x64xf32, #tpu.memory_space<vmem>>, %arg9: memref<1x64xf32, #tpu.memory_space<vmem>>, %arg10: memref<32x32xf32, #tpu.memory_space<vmem>>, %arg11: memref<1x32xf32, #tpu.memory_space<vmem>>, %arg12: memref<1x32xf32, #tpu.memory_space<vmem>>, %arg13: memref<1x32xf32, #tpu.memory_space<vmem>>, %arg14: memref<32x128xf32, #tpu.memory_space<vmem>>, %arg15: memref<1x128xf32, #tpu.memory_space<vmem>>, %arg16: memref<128x32xf32, #tpu.memory_space<vmem>>, %arg17: memref<1x32xf32, #tpu.memory_space<vmem>>, %arg18: memref<1x32xf32, #tpu.memory_space<vmem>>, %arg19: memref<1x32xf32, #tpu.memory_space<vmem>>, %arg20: memref<1x8x32xf32, #tpu.memory_space<vmem>>, %arg21: memref<4x8x8xf32, #tpu.memory_space<vmem>>, %arg22: memref<4x8x8xf32, #tpu.memory_space<vmem>>) attributes {dimension_semantics = [#tpu.dimension_semantics<parallel>, #tpu.dimension_semantics<arbitrary>], iteration_bounds = array<i64: 2, 1>, scalar_prefetch = 0 : i64, scratch_operands = 2 : i64, tpu.core_type = #tpu.core_type<tc>, window_params = [{transform_indices = @transform_0, window_bounds = array<i64: 1, 8, 32>}, {pipeline_mode = #tpu.pipeline_mode<synchronous>, transform_indices = @transform_1, window_bounds = array<i64: 8, 8>}, {pipeline_mode = #tpu.pipeline_mode<synchronous>, transform_indices = @transform_2, window_bounds = array<i64: 1, 32>}, {pipeline_mode = #tpu.pipeline_mode<synchronous>, transform_indices = @transform_3, window_bounds = array<i64: 1, 32>}, {pipeline_mode = #tpu.pipeline_mode<synchronous>, transform_indices = @transform_4, window_bounds = array<i64: 32, 32>}, {pipeline_mode = #tpu.pipeline_mode<synchronous>, transform_indices = @transform_5, window_bounds = array<i64: 1, 32>}, {pipeline_mode = #tpu.pipeline_mode<synchronous>, transform_indices = @transform_6, window_bounds = array<i64: 32, 64>}, {pipeline_mode = #tpu.pipeline_mode<synchronous>, transform_indices = @transform_7, window_bounds = array<i64: 1, 64>}, {pipeline_mode = #tpu.pipeline_mode<synchronous>, transform_indices = @transform_8, window_bounds = array<i64: 32, 32>}, {pipeline_mode = #tpu.pipeline_mode<synchronous>, transform_indices = @transform_9, window_bounds = array<i64: 1, 32>}, {pipeline_mode = #tpu.pipeline_mode<synchronous>, transform_indices = @transform_10, window_bounds = array<i64: 1, 32>}, {pipeline_mode = #tpu.pipeline_mode<synchronous>, transform_indices = @transform_11, window_bounds = array<i64: 1, 32>}, {pipeline_mode = #tpu.pipeline_mode<synchronous>, transform_indices = @transform_12, window_bounds = array<i64: 32, 128>}, {pipeline_mode = #tpu.pipeline_mode<synchronous>, transform_indices = @transform_13, window_bounds = array<i64: 1, 128>}, {pipeline_mode = #tpu.pipeline_mode<synchronous>, transform_indices = @transform_14, window_bounds = array<i64: 128, 32>}, {pipeline_mode = #tpu.pipeline_mode<synchronous>, transform_indices = @transform_15, window_bounds = array<i64: 1, 32>}, {pipeline_mode = #tpu.pipeline_mode<synchronous>, transform_indices = @transform_16, window_bounds = array<i64: 1, 32>}, {pipeline_mode = #tpu.pipeline_mode<synchronous>, transform_indices = @transform_17, window_bounds = array<i64: 1, 32>}, {transform_indices = @transform_18, window_bounds = array<i64: 1, 8, 32>}]} {
    %c0_i32 = arith.constant 0 : i32
    %0 = arith.cmpi eq, %arg1, %c0_i32 : i32
    %1 = arith.extui %0 : i1 to i32
    %c0_i32_0 = arith.constant 0 : i32
    %2 = arith.cmpi ne, %1, %c0_i32_0 : i32
    scf.if %2 {
      %c0_69 = arith.constant 0 : index
      %c0_70 = arith.constant 0 : index
      %c0_71 = arith.constant 0 : index
      %182 = vector.load %arg2[%c0_69, %c0_70, %c0_71] : memref<1x8x32xf32, #tpu.memory_space<vmem>>, vector<1x8x32xf32>
      %183 = vector.shape_cast %182 : vector<1x8x32xf32> to vector<8x32xf32>
      %c0_72 = arith.constant 0 : index
      %c0_73 = arith.constant 0 : index
      %184 = vector.load %arg4[%c0_72, %c0_73] : memref<1x32xf32, #tpu.memory_space<vmem>>, vector<1x32xf32>
      %185 = vector.shape_cast %184 : vector<1x32xf32> to vector<32xf32>
      %c0_74 = arith.constant 0 : index
      %c0_75 = arith.constant 0 : index
      %186 = vector.load %arg5[%c0_74, %c0_75] : memref<1x32xf32, #tpu.memory_space<vmem>>, vector<1x32xf32>
      %187 = vector.shape_cast %186 : vector<1x32xf32> to vector<32xf32>
      %cst_76 = arith.constant dense<0.000000e+00> : vector<8xf32>
      %188 = vector.multi_reduction <add>, %183, %cst_76 [1] : vector<8x32xf32> to vector<8xf32>
      %189 = vector.shape_cast %188 : vector<8xf32> to vector<8x1xf32>
      %cst_77 = arith.constant 3.200000e+01 : f32
      %190 = vector.broadcast %cst_77 : f32 to vector<8x1xf32>
      %191 = arith.divf %189, %190 : vector<8x1xf32>
      %192 = vector.broadcast %191 : vector<8x1xf32> to vector<8x32xf32>
      %193 = arith.subf %183, %192 : vector<8x32xf32>
      %194 = arith.mulf %193, %193 : vector<8x32xf32>
      %cst_78 = arith.constant dense<0.000000e+00> : vector<8xf32>
      %195 = vector.multi_reduction <add>, %194, %cst_78 [1] : vector<8x32xf32> to vector<8xf32>
      %196 = vector.shape_cast %195 : vector<8xf32> to vector<8x1xf32>
      %cst_79 = arith.constant 3.200000e+01 : f32
      %197 = vector.broadcast %cst_79 : f32 to vector<8x1xf32>
      %198 = arith.divf %196, %197 : vector<8x1xf32>
      %199 = vector.broadcast %191 : vector<8x1xf32> to vector<8x32xf32>
      %200 = arith.subf %183, %199 : vector<8x32xf32>
      %cst_80 = arith.constant 9.99999974E-6 : f32
      %201 = vector.broadcast %cst_80 : f32 to vector<8x1xf32>
      %202 = arith.addf %198, %201 : vector<8x1xf32>
      %203 = math.rsqrt %202 : vector<8x1xf32>
      %204 = vector.broadcast %203 : vector<8x1xf32> to vector<8x32xf32>
      %205 = arith.mulf %200, %204 : vector<8x32xf32>
      %206 = vector.shape_cast %185 : vector<32xf32> to vector<1x32xf32>
      %207 = vector.broadcast %206 : vector<1x32xf32> to vector<8x32xf32>
      %208 = arith.mulf %205, %207 : vector<8x32xf32>
      %209 = vector.shape_cast %187 : vector<32xf32> to vector<1x32xf32>
      %210 = vector.broadcast %209 : vector<1x32xf32> to vector<8x32xf32>
      %211 = arith.addf %208, %210 : vector<8x32xf32>
      %c0_81 = arith.constant 0 : index
      %c0_82 = arith.constant 0 : index
      %212 = vector.load %arg8[%c0_81, %c0_82] : memref<32x64xf32, #tpu.memory_space<vmem>>, vector<32x64xf32>
      %cst_83 = arith.constant dense<0.000000e+00> : vector<8x64xf32>
      %213 = tpu.matmul %211, %212, %cst_83 {dimension_numbers = #tpu.dot_dimension_numbers<[1], [0], [0], [1], [0, 0, 1, 1], [], []>} : vector<8x32xf32>, vector<32x64xf32>, vector<8x64xf32> -> vector<8x64xf32>
      %c0_84 = arith.constant 0 : index
      %c0_85 = arith.constant 0 : index
      %214 = vector.load %arg9[%c0_84, %c0_85] : memref<1x64xf32, #tpu.memory_space<vmem>>, vector<1x64xf32>
      %215 = vector.shape_cast %214 : vector<1x64xf32> to vector<64xf32>
      %216 = vector.shape_cast %215 : vector<64xf32> to vector<1x64xf32>
      %217 = vector.broadcast %216 : vector<1x64xf32> to vector<8x64xf32>
      %218 = arith.addf %213, %217 : vector<8x64xf32>
      %219 = vector.extract_strided_slice %218 {offsets = [0, 0], sizes = [8, 8], strides = [1, 1]} : vector<8x64xf32> to vector<8x8xf32>
      %220 = vector.extract_strided_slice %218 {offsets = [0, 8], sizes = [8, 8], strides = [1, 1]} : vector<8x64xf32> to vector<8x8xf32>
      %221 = vector.extract_strided_slice %218 {offsets = [0, 16], sizes = [8, 8], strides = [1, 1]} : vector<8x64xf32> to vector<8x8xf32>
      %222 = vector.extract_strided_slice %218 {offsets = [0, 24], sizes = [8, 8], strides = [1, 1]} : vector<8x64xf32> to vector<8x8xf32>
      %223 = vector.shape_cast %219 : vector<8x8xf32> to vector<1x8x8xf32>
      %224 = vector.shape_cast %220 : vector<8x8xf32> to vector<1x8x8xf32>
      %225 = vector.shape_cast %221 : vector<8x8xf32> to vector<1x8x8xf32>
      %226 = vector.shape_cast %222 : vector<8x8xf32> to vector<1x8x8xf32>
      %227 = tpu.concatenate %223, %224, %225, %226 in 0 : vector<1x8x8xf32>, vector<1x8x8xf32>, vector<1x8x8xf32>, vector<1x8x8xf32> -> vector<4x8x8xf32>
      %228 = vector.extract_strided_slice %218 {offsets = [0, 32], sizes = [8, 8], strides = [1, 1]} : vector<8x64xf32> to vector<8x8xf32>
      %229 = vector.extract_strided_slice %218 {offsets = [0, 40], sizes = [8, 8], strides = [1, 1]} : vector<8x64xf32> to vector<8x8xf32>
      %230 = vector.extract_strided_slice %218 {offsets = [0, 48], sizes = [8, 8], strides = [1, 1]} : vector<8x64xf32> to vector<8x8xf32>
      %231 = vector.extract_strided_slice %218 {offsets = [0, 56], sizes = [8, 8], strides = [1, 1]} : vector<8x64xf32> to vector<8x8xf32>
      %232 = vector.shape_cast %228 : vector<8x8xf32> to vector<1x8x8xf32>
      %233 = vector.shape_cast %229 : vector<8x8xf32> to vector<1x8x8xf32>
      %234 = vector.shape_cast %230 : vector<8x8xf32> to vector<1x8x8xf32>
      %235 = vector.shape_cast %231 : vector<8x8xf32> to vector<1x8x8xf32>
      %236 = tpu.concatenate %232, %233, %234, %235 in 0 : vector<1x8x8xf32>, vector<1x8x8xf32>, vector<1x8x8xf32>, vector<1x8x8xf32> -> vector<4x8x8xf32>
      %c0_86 = arith.constant 0 : index
      %c0_87 = arith.constant 0 : index
      %237 = vector.load %arg3[%c0_86, %c0_87] : memref<8x8xf32, #tpu.memory_space<vmem>>, vector<8x8xf32>
      %238 = vector.shape_cast %237 : vector<8x8xf32> to vector<1x8x8xf32>
      %239 = vector.broadcast %238 : vector<1x8x8xf32> to vector<4x8x8xf32>
      %240 = arith.addf %227, %239 : vector<4x8x8xf32>
      %c0_88 = arith.constant 0 : index
      %c0_89 = arith.constant 0 : index
      %c0_90 = arith.constant 0 : index
      %241 = vector.load %arg21[%c0_88, %c0_89, %c0_90] : memref<4x8x8xf32, #tpu.memory_space<vmem>>, vector<4x8x8xf32>
      tpu.vector_store %arg21[%c0_88, %c0_89, %c0_90], %240 {strides = array<i32>} : memref<4x8x8xf32, #tpu.memory_space<vmem>>, vector<4x8x8xf32>,
      %c0_91 = arith.constant 0 : index
      %c0_92 = arith.constant 0 : index
      %c0_93 = arith.constant 0 : index
      %242 = vector.load %arg22[%c0_91, %c0_92, %c0_93] : memref<4x8x8xf32, #tpu.memory_space<vmem>>, vector<4x8x8xf32>
      tpu.vector_store %arg22[%c0_91, %c0_92, %c0_93], %236 {strides = array<i32>} : memref<4x8x8xf32, #tpu.memory_space<vmem>>, vector<4x8x8xf32>,
    } else {
    }
    %c8_i32 = arith.constant 8 : i32
    %3 = arith.muli %arg1, %c8_i32 : i32
    %4 = tpu.assume_multiple %3, 8 : i32
    %c0 = arith.constant 0 : index
    %5 = arith.index_cast %4 : i32 to index
    %c0_1 = arith.constant 0 : index
    %6 = vector.load %arg2[%c0, %5, %c0_1] : memref<1x8x32xf32, #tpu.memory_space<vmem>>, vector<1x8x32xf32>
    %7 = vector.shape_cast %6 : vector<1x8x32xf32> to vector<8x32xf32>
    %c0_2 = arith.constant 0 : index
    %c0_3 = arith.constant 0 : index
    %8 = vector.load %arg4[%c0_2, %c0_3] : memref<1x32xf32, #tpu.memory_space<vmem>>, vector<1x32xf32>
    %9 = vector.shape_cast %8 : vector<1x32xf32> to vector<32xf32>
    %c0_4 = arith.constant 0 : index
    %c0_5 = arith.constant 0 : index
    %10 = vector.load %arg5[%c0_4, %c0_5] : memref<1x32xf32, #tpu.memory_space<vmem>>, vector<1x32xf32>
    %11 = vector.shape_cast %10 : vector<1x32xf32> to vector<32xf32>
    %cst = arith.constant dense<0.000000e+00> : vector<8xf32>
    %12 = vector.multi_reduction <add>, %7, %cst [1] : vector<8x32xf32> to vector<8xf32>
    %13 = vector.shape_cast %12 : vector<8xf32> to vector<8x1xf32>
    %cst_6 = arith.constant 3.200000e+01 : f32
    %14 = vector.broadcast %cst_6 : f32 to vector<8x1xf32>
    %15 = arith.divf %13, %14 : vector<8x1xf32>
    %16 = vector.broadcast %15 : vector<8x1xf32> to vector<8x32xf32>
    %17 = arith.subf %7, %16 : vector<8x32xf32>
    %18 = arith.mulf %17, %17 : vector<8x32xf32>
    %cst_7 = arith.constant dense<0.000000e+00> : vector<8xf32>
    %19 = vector.multi_reduction <add>, %18, %cst_7 [1] : vector<8x32xf32> to vector<8xf32>
    %20 = vector.shape_cast %19 : vector<8xf32> to vector<8x1xf32>
    %cst_8 = arith.constant 3.200000e+01 : f32
    %21 = vector.broadcast %cst_8 : f32 to vector<8x1xf32>
    %22 = arith.divf %20, %21 : vector<8x1xf32>
    %23 = vector.broadcast %15 : vector<8x1xf32> to vector<8x32xf32>
    %24 = arith.subf %7, %23 : vector<8x32xf32>
    %cst_9 = arith.constant 9.99999974E-6 : f32
    %25 = vector.broadcast %cst_9 : f32 to vector<8x1xf32>
    %26 = arith.addf %22, %25 : vector<8x1xf32>
    %27 = math.rsqrt %26 : vector<8x1xf32>
    %28 = vector.broadcast %27 : vector<8x1xf32> to vector<8x32xf32>
    %29 = arith.mulf %24, %28 : vector<8x32xf32>
    %30 = vector.shape_cast %9 : vector<32xf32> to vector<1x32xf32>
    %31 = vector.broadcast %30 : vector<1x32xf32> to vector<8x32xf32>
    %32 = arith.mulf %29, %31 : vector<8x32xf32>
    %33 = vector.shape_cast %11 : vector<32xf32> to vector<1x32xf32>
    %34 = vector.broadcast %33 : vector<1x32xf32> to vector<8x32xf32>
    %35 = arith.addf %32, %34 : vector<8x32xf32>
    %c0_10 = arith.constant 0 : index
    %c0_11 = arith.constant 0 : index
    %36 = vector.load %arg6[%c0_10, %c0_11] : memref<32x32xf32, #tpu.memory_space<vmem>>, vector<32x32xf32>
    %cst_12 = arith.constant dense<0.000000e+00> : vector<8x32xf32>
    %37 = tpu.matmul %35, %36, %cst_12 {dimension_numbers = #tpu.dot_dimension_numbers<[1], [0], [0], [1], [0, 0, 1, 1], [], []>} : vector<8x32xf32>, vector<32x32xf32>, vector<8x32xf32> -> vector<8x32xf32>
    %c0_13 = arith.constant 0 : index
    %c0_14 = arith.constant 0 : index
    %38 = vector.load %arg7[%c0_13, %c0_14] : memref<1x32xf32, #tpu.memory_space<vmem>>, vector<1x32xf32>
    %39 = vector.shape_cast %38 : vector<1x32xf32> to vector<32xf32>
    %40 = vector.shape_cast %39 : vector<32xf32> to vector<1x32xf32>
    %41 = vector.broadcast %40 : vector<1x32xf32> to vector<8x32xf32>
    %42 = arith.addf %37, %41 : vector<8x32xf32>
    %43 = vector.extract_strided_slice %42 {offsets = [0, 0], sizes = [8, 8], strides = [1, 1]} : vector<8x32xf32> to vector<8x8xf32>
    %44 = vector.extract_strided_slice %42 {offsets = [0, 8], sizes = [8, 8], strides = [1, 1]} : vector<8x32xf32> to vector<8x8xf32>
    %45 = vector.extract_strided_slice %42 {offsets = [0, 16], sizes = [8, 8], strides = [1, 1]} : vector<8x32xf32> to vector<8x8xf32>
    %46 = vector.extract_strided_slice %42 {offsets = [0, 24], sizes = [8, 8], strides = [1, 1]} : vector<8x32xf32> to vector<8x8xf32>
    %47 = vector.shape_cast %43 : vector<8x8xf32> to vector<1x8x8xf32>
    %48 = vector.shape_cast %44 : vector<8x8xf32> to vector<1x8x8xf32>
    %49 = vector.shape_cast %45 : vector<8x8xf32> to vector<1x8x8xf32>
    %50 = vector.shape_cast %46 : vector<8x8xf32> to vector<1x8x8xf32>
    %51 = tpu.concatenate %47, %48, %49, %50 in 0 : vector<1x8x8xf32>, vector<1x8x8xf32>, vector<1x8x8xf32>, vector<1x8x8xf32> -> vector<4x8x8xf32>
    %52 = arith.index_cast %4 : i32 to index
    %c0_15 = arith.constant 0 : index
    %53 = vector.load %arg3[%52, %c0_15] : memref<8x8xf32, #tpu.memory_space<vmem>>, vector<8x8xf32>
    %54 = vector.shape_cast %53 : vector<8x8xf32> to vector<1x8x8xf32>
    %55 = vector.broadcast %54 : vector<1x8x8xf32> to vector<4x8x8xf32>
    %56 = arith.addf %51, %55 : vector<4x8x8xf32>
    %cst_16 = arith.constant 0.353553385 : f32
    %57 = vector.broadcast %cst_16 : f32 to vector<4x8x8xf32>
    %58 = arith.mulf %56, %57 : vector<4x8x8xf32>
    %cst_17 = arith.constant 0xFF800000 : f32
    %59 = vector.broadcast %cst_17 : f32 to vector<4x8x1xf32>
    %cst_18 = arith.constant 0.000000e+00 : f32
    %60 = vector.broadcast %cst_18 : f32 to vector<4x8x1xf32>
    %cst_19 = arith.constant 0.000000e+00 : f32
    %61 = vector.broadcast %cst_19 : f32 to vector<4x8x8xf32>
    %c0_20 = arith.constant 0 : index
    %c0_21 = arith.constant 0 : index
    %c0_22 = arith.constant 0 : index
    %62 = vector.load %arg21[%c0_20, %c0_21, %c0_22] : memref<4x8x8xf32, #tpu.memory_space<vmem>>, vector<4x8x8xf32>
    %c0_23 = arith.constant 0 : index
    %c0_24 = arith.constant 0 : index
    %c0_25 = arith.constant 0 : index
    %63 = vector.load %arg22[%c0_23, %c0_24, %c0_25] : memref<4x8x8xf32, #tpu.memory_space<vmem>>, vector<4x8x8xf32>
    "tpu.trace_start"() <{level = 10 : i32, message = "hqd,hkd->hqk"}> : () -> ()
    %cst_26 = arith.constant dense<0.000000e+00> : vector<4x8x8xf32>
    %64 = tpu.matmul %58, %62, %cst_26 {dimension_numbers = #tpu.dot_dimension_numbers<[2], [2], [1], [1], [0, 0, 0, 1, 1, 1], [0], [0]>} : vector<4x8x8xf32>, vector<4x8x8xf32>, vector<4x8x8xf32> -> vector<4x8x8xf32>
    "tpu.trace_stop"() : () -> ()
    %cst_27 = arith.constant dense<0xFF800000> : vector<4x8xf32>
    %65 = vector.multi_reduction <maximumf>, %64, %cst_27 [2] : vector<4x8x8xf32> to vector<4x8xf32>
    %66 = vector.shape_cast %65 : vector<4x8xf32> to vector<4x8x1xf32>
    %67 = arith.maximumf %59, %66 : vector<4x8x1xf32>
    %68 = arith.subf %59, %67 : vector<4x8x1xf32>
    %69 = math.exp %68 : vector<4x8x1xf32>
    %70 = vector.broadcast %67 : vector<4x8x1xf32> to vector<4x8x8xf32>
    %71 = arith.subf %64, %70 : vector<4x8x8xf32>
    %72 = math.exp %71 : vector<4x8x8xf32>
    %73 = arith.mulf %69, %60 : vector<4x8x1xf32>
    %cst_28 = arith.constant dense<0.000000e+00> : vector<4x8xf32>
    %74 = vector.multi_reduction <add>, %72, %cst_28 [2] : vector<4x8x8xf32> to vector<4x8xf32>
    %75 = vector.shape_cast %74 : vector<4x8xf32> to vector<4x8x1xf32>
    %76 = arith.addf %73, %75 : vector<4x8x1xf32>
    %77 = vector.broadcast %69 : vector<4x8x1xf32> to vector<4x8x8xf32>
    %78 = arith.mulf %77, %61 : vector<4x8x8xf32>
    "tpu.trace_start"() <{level = 10 : i32, message = "hqk,hkd->hqd"}> : () -> ()
    %cst_29 = arith.constant dense<0.000000e+00> : vector<4x8x8xf32>
    %79 = tpu.matmul %72, %63, %cst_29 {dimension_numbers = #tpu.dot_dimension_numbers<[2], [1], [1], [2], [0, 0, 0, 1, 1, 2], [0], [0]>} : vector<4x8x8xf32>, vector<4x8x8xf32>, vector<4x8x8xf32> -> vector<4x8x8xf32>
    "tpu.trace_stop"() : () -> ()
    %80 = arith.addf %78, %79 : vector<4x8x8xf32>
    %81 = vector.broadcast %76 : vector<4x8x1xf32> to vector<4x8x8xf32>
    %82 = arith.divf %80, %81 : vector<4x8x8xf32>
    %83 = vector.extract_strided_slice %82 {offsets = [0, 0, 0], sizes = [1, 8, 8], strides = [1, 1, 1]} : vector<4x8x8xf32> to vector<1x8x8xf32>
    %84 = vector.shape_cast %83 : vector<1x8x8xf32> to vector<8x8xf32>
    %85 = vector.extract_strided_slice %82 {offsets = [1, 0, 0], sizes = [1, 8, 8], strides = [1, 1, 1]} : vector<4x8x8xf32> to vector<1x8x8xf32>
    %86 = vector.shape_cast %85 : vector<1x8x8xf32> to vector<8x8xf32>
    %87 = vector.extract_strided_slice %82 {offsets = [2, 0, 0], sizes = [1, 8, 8], strides = [1, 1, 1]} : vector<4x8x8xf32> to vector<1x8x8xf32>
    %88 = vector.shape_cast %87 : vector<1x8x8xf32> to vector<8x8xf32>
    %89 = vector.extract_strided_slice %82 {offsets = [3, 0, 0], sizes = [1, 8, 8], strides = [1, 1, 1]} : vector<4x8x8xf32> to vector<1x8x8xf32>
    %90 = vector.shape_cast %89 : vector<1x8x8xf32> to vector<8x8xf32>
    %91 = tpu.concatenate %84, %86, %88, %90 in 1 : vector<8x8xf32>, vector<8x8xf32>, vector<8x8xf32>, vector<8x8xf32> -> vector<8x32xf32>
    %c0_30 = arith.constant 0 : index
    %c0_31 = arith.constant 0 : index
    %92 = vector.load %arg10[%c0_30, %c0_31] : memref<32x32xf32, #tpu.memory_space<vmem>>, vector<32x32xf32>
    %cst_32 = arith.constant dense<0.000000e+00> : vector<8x32xf32>
    %93 = tpu.matmul %91, %92, %cst_32 {dimension_numbers = #tpu.dot_dimension_numbers<[1], [0], [0], [1], [0, 0, 1, 1], [], []>} : vector<8x32xf32>, vector<32x32xf32>, vector<8x32xf32> -> vector<8x32xf32>
    %c0_33 = arith.constant 0 : index
    %c0_34 = arith.constant 0 : index
    %94 = vector.load %arg11[%c0_33, %c0_34] : memref<1x32xf32, #tpu.memory_space<vmem>>, vector<1x32xf32>
    %95 = vector.shape_cast %94 : vector<1x32xf32> to vector<32xf32>
    %96 = vector.shape_cast %95 : vector<32xf32> to vector<1x32xf32>
    %97 = vector.broadcast %96 : vector<1x32xf32> to vector<8x32xf32>
    %98 = arith.addf %93, %97 : vector<8x32xf32>
    %99 = arith.addf %7, %98 : vector<8x32xf32>
    %c0_35 = arith.constant 0 : index
    %c0_36 = arith.constant 0 : index
    %100 = vector.load %arg12[%c0_35, %c0_36] : memref<1x32xf32, #tpu.memory_space<vmem>>, vector<1x32xf32>
    %101 = vector.shape_cast %100 : vector<1x32xf32> to vector<32xf32>
    %c0_37 = arith.constant 0 : index
    %c0_38 = arith.constant 0 : index
    %102 = vector.load %arg13[%c0_37, %c0_38] : memref<1x32xf32, #tpu.memory_space<vmem>>, vector<1x32xf32>
    %103 = vector.shape_cast %102 : vector<1x32xf32> to vector<32xf32>
    %cst_39 = arith.constant dense<0.000000e+00> : vector<8xf32>
    %104 = vector.multi_reduction <add>, %99, %cst_39 [1] : vector<8x32xf32> to vector<8xf32>
    %105 = vector.shape_cast %104 : vector<8xf32> to vector<8x1xf32>
    %cst_40 = arith.constant 3.200000e+01 : f32
    %106 = vector.broadcast %cst_40 : f32 to vector<8x1xf32>
    %107 = arith.divf %105, %106 : vector<8x1xf32>
    %108 = vector.broadcast %107 : vector<8x1xf32> to vector<8x32xf32>
    %109 = arith.subf %99, %108 : vector<8x32xf32>
    %110 = arith.mulf %109, %109 : vector<8x32xf32>
    %cst_41 = arith.constant dense<0.000000e+00> : vector<8xf32>
    %111 = vector.multi_reduction <add>, %110, %cst_41 [1] : vector<8x32xf32> to vector<8xf32>
    %112 = vector.shape_cast %111 : vector<8xf32> to vector<8x1xf32>
    %cst_42 = arith.constant 3.200000e+01 : f32
    %113 = vector.broadcast %cst_42 : f32 to vector<8x1xf32>
    %114 = arith.divf %112, %113 : vector<8x1xf32>
    %115 = vector.broadcast %107 : vector<8x1xf32> to vector<8x32xf32>
    %116 = arith.subf %99, %115 : vector<8x32xf32>
    %cst_43 = arith.constant 9.99999974E-6 : f32
    %117 = vector.broadcast %cst_43 : f32 to vector<8x1xf32>
    %118 = arith.addf %114, %117 : vector<8x1xf32>
    %119 = math.rsqrt %118 : vector<8x1xf32>
    %120 = vector.broadcast %119 : vector<8x1xf32> to vector<8x32xf32>
    %121 = arith.mulf %116, %120 : vector<8x32xf32>
    %122 = vector.shape_cast %101 : vector<32xf32> to vector<1x32xf32>
    %123 = vector.broadcast %122 : vector<1x32xf32> to vector<8x32xf32>
    %124 = arith.mulf %121, %123 : vector<8x32xf32>
    %125 = vector.shape_cast %103 : vector<32xf32> to vector<1x32xf32>
    %126 = vector.broadcast %125 : vector<1x32xf32> to vector<8x32xf32>
    %127 = arith.addf %124, %126 : vector<8x32xf32>
    %c0_44 = arith.constant 0 : index
    %c0_45 = arith.constant 0 : index
    %128 = vector.load %arg14[%c0_44, %c0_45] : memref<32x128xf32, #tpu.memory_space<vmem>>, vector<32x128xf32>
    %cst_46 = arith.constant dense<0.000000e+00> : vector<8x128xf32>
    %129 = tpu.matmul %127, %128, %cst_46 {dimension_numbers = #tpu.dot_dimension_numbers<[1], [0], [0], [1], [0, 0, 1, 1], [], []>} : vector<8x32xf32>, vector<32x128xf32>, vector<8x128xf32> -> vector<8x128xf32>
    %c0_47 = arith.constant 0 : index
    %c0_48 = arith.constant 0 : index
    %130 = vector.load %arg15[%c0_47, %c0_48] : memref<1x128xf32, #tpu.memory_space<vmem>>, vector<1x128xf32>
    %131 = vector.shape_cast %130 : vector<1x128xf32> to vector<128xf32>
    %132 = vector.shape_cast %131 : vector<128xf32> to vector<1x128xf32>
    %133 = vector.broadcast %132 : vector<1x128xf32> to vector<8x128xf32>
    %134 = arith.addf %129, %133 : vector<8x128xf32>
    %cst_49 = arith.constant 5.000000e-01 : f32
    %135 = vector.broadcast %cst_49 : f32 to vector<8x128xf32>
    %136 = arith.mulf %135, %134 : vector<8x128xf32>
    %cst_50 = arith.constant 0.707106769 : f32
    %137 = vector.broadcast %cst_50 : f32 to vector<8x128xf32>
    %138 = arith.mulf %134, %137 : vector<8x128xf32>
    %139 = math.erf %138 : vector<8x128xf32>
    %cst_51 = arith.constant 1.000000e+00 : f32
    %140 = vector.broadcast %cst_51 : f32 to vector<8x128xf32>
    %141 = arith.addf %140, %139 : vector<8x128xf32>
    %142 = arith.mulf %136, %141 : vector<8x128xf32>
    %c0_52 = arith.constant 0 : index
    %c0_53 = arith.constant 0 : index
    %143 = vector.load %arg16[%c0_52, %c0_53] : memref<128x32xf32, #tpu.memory_space<vmem>>, vector<128x32xf32>
    %cst_54 = arith.constant dense<0.000000e+00> : vector<8x32xf32>
    %144 = tpu.matmul %142, %143, %cst_54 {dimension_numbers = #tpu.dot_dimension_numbers<[1], [0], [0], [1], [0, 0, 1, 1], [], []>} : vector<8x128xf32>, vector<128x32xf32>, vector<8x32xf32> -> vector<8x32xf32>
    %c0_55 = arith.constant 0 : index
    %c0_56 = arith.constant 0 : index
    %145 = vector.load %arg17[%c0_55, %c0_56] : memref<1x32xf32, #tpu.memory_space<vmem>>, vector<1x32xf32>
    %146 = vector.shape_cast %145 : vector<1x32xf32> to vector<32xf32>
    %147 = vector.shape_cast %146 : vector<32xf32> to vector<1x32xf32>
    %148 = vector.broadcast %147 : vector<1x32xf32> to vector<8x32xf32>
    %149 = arith.addf %144, %148 : vector<8x32xf32>
    %150 = arith.addf %99, %149 : vector<8x32xf32>
    %c0_57 = arith.constant 0 : index
    %c0_58 = arith.constant 0 : index
    %151 = vector.load %arg18[%c0_57, %c0_58] : memref<1x32xf32, #tpu.memory_space<vmem>>, vector<1x32xf32>
    %152 = vector.shape_cast %151 : vector<1x32xf32> to vector<32xf32>
    %c0_59 = arith.constant 0 : index
    %c0_60 = arith.constant 0 : index
    %153 = vector.load %arg19[%c0_59, %c0_60] : memref<1x32xf32, #tpu.memory_space<vmem>>, vector<1x32xf32>
    %154 = vector.shape_cast %153 : vector<1x32xf32> to vector<32xf32>
    %cst_61 = arith.constant dense<0.000000e+00> : vector<8xf32>
    %155 = vector.multi_reduction <add>, %150, %cst_61 [1] : vector<8x32xf32> to vector<8xf32>
    %156 = vector.shape_cast %155 : vector<8xf32> to vector<8x1xf32>
    %cst_62 = arith.constant 3.200000e+01 : f32
    %157 = vector.broadcast %cst_62 : f32 to vector<8x1xf32>
    %158 = arith.divf %156, %157 : vector<8x1xf32>
    %159 = vector.broadcast %158 : vector<8x1xf32> to vector<8x32xf32>
    %160 = arith.subf %150, %159 : vector<8x32xf32>
    %161 = arith.mulf %160, %160 : vector<8x32xf32>
    %cst_63 = arith.constant dense<0.000000e+00> : vector<8xf32>
    %162 = vector.multi_reduction <add>, %161, %cst_63 [1] : vector<8x32xf32> to vector<8xf32>
    %163 = vector.shape_cast %162 : vector<8xf32> to vector<8x1xf32>
    %cst_64 = arith.constant 3.200000e+01 : f32
    %164 = vector.broadcast %cst_64 : f32 to vector<8x1xf32>
    %165 = arith.divf %163, %164 : vector<8x1xf32>
    %166 = vector.broadcast %158 : vector<8x1xf32> to vector<8x32xf32>
    %167 = arith.subf %150, %166 : vector<8x32xf32>
    %cst_65 = arith.constant 9.99999974E-6 : f32
    %168 = vector.broadcast %cst_65 : f32 to vector<8x1xf32>
    %169 = arith.addf %165, %168 : vector<8x1xf32>
    %170 = math.rsqrt %169 : vector<8x1xf32>
    %171 = vector.broadcast %170 : vector<8x1xf32> to vector<8x32xf32>
    %172 = arith.mulf %167, %171 : vector<8x32xf32>
    %173 = vector.shape_cast %152 : vector<32xf32> to vector<1x32xf32>
    %174 = vector.broadcast %173 : vector<1x32xf32> to vector<8x32xf32>
    %175 = arith.mulf %172, %174 : vector<8x32xf32>
    %176 = vector.shape_cast %154 : vector<32xf32> to vector<1x32xf32>
    %177 = vector.broadcast %176 : vector<1x32xf32> to vector<8x32xf32>
    %178 = arith.addf %175, %177 : vector<8x32xf32>
    %c0_66 = arith.constant 0 : index
    %c0_67 = arith.constant 0 : index
    %c0_68 = arith.constant 0 : index
    %179 = vector.load %arg20[%c0_66, %c0_67, %c0_68] : memref<1x8x32xf32, #tpu.memory_space<vmem>>, vector<1x8x32xf32>
    %180 = vector.shape_cast %179 : vector<1x8x32xf32> to vector<8x32xf32>
    %181 = vector.shape_cast %178 : vector<8x32xf32> to vector<1x8x32xf32>
    tpu.vector_store %arg20[%c0_66, %c0_67, %c0_68], %181 {strides = array<i32>} : memref<1x8x32xf32, #tpu.memory_space<vmem>>, vector<1x8x32xf32>,
    return
  }
  func.func @transform_0(%arg0: i32, %arg1: i32) -> (i32, i32, i32) {
    %c0_i32 = arith.constant 0 : i32
    %c0_i32_0 = arith.constant 0 : i32
    %c0_i32_1 = arith.constant 0 : i32
    return %arg0, %c0_i32, %c0_i32_0 : i32, i32, i32
  }
  func.func @transform_1(%arg0: i32, %arg1: i32) -> (i32, i32) {
    %c0_i32 = arith.constant 0 : i32
    %c0_i32_0 = arith.constant 0 : i32
    %c0_i32_1 = arith.constant 0 : i32
    return %c0_i32, %c0_i32_0 : i32, i32
  }
  func.func @transform_2(%arg0: i32, %arg1: i32) -> (i32, i32) {
    %c0_i32 = arith.constant 0 : i32
    %c0_i32_0 = arith.constant 0 : i32
    %c0_i32_1 = arith.constant 0 : i32
    return %c0_i32, %c0_i32_0 : i32, i32
  }
  func.func @transform_3(%arg0: i32, %arg1: i32) -> (i32, i32) {
    %c0_i32 = arith.constant 0 : i32
    %c0_i32_0 = arith.constant 0 : i32
    %c0_i32_1 = arith.constant 0 : i32
    return %c0_i32, %c0_i32_0 : i32, i32
  }
  func.func @transform_4(%arg0: i32, %arg1: i32) -> (i32, i32) {
    %c0_i32 = arith.constant 0 : i32
    %c0_i32_0 = arith.constant 0 : i32
    %c0_i32_1 = arith.constant 0 : i32
    return %c0_i32, %c0_i32_0 : i32, i32
  }
  func.func @transform_5(%arg0: i32, %arg1: i32) -> (i32, i32) {
    %c0_i32 = arith.constant 0 : i32
    %c0_i32_0 = arith.constant 0 : i32
    %c0_i32_1 = arith.constant 0 : i32
    return %c0_i32, %c0_i32_0 : i32, i32
  }
  func.func @transform_6(%arg0: i32, %arg1: i32) -> (i32, i32) {
    %c0_i32 = arith.constant 0 : i32
    %c0_i32_0 = arith.constant 0 : i32
    %c0_i32_1 = arith.constant 0 : i32
    return %c0_i32, %c0_i32_0 : i32, i32
  }
  func.func @transform_7(%arg0: i32, %arg1: i32) -> (i32, i32) {
    %c0_i32 = arith.constant 0 : i32
    %c0_i32_0 = arith.constant 0 : i32
    %c0_i32_1 = arith.constant 0 : i32
    return %c0_i32, %c0_i32_0 : i32, i32
  }
  func.func @transform_8(%arg0: i32, %arg1: i32) -> (i32, i32) {
    %c0_i32 = arith.constant 0 : i32
    %c0_i32_0 = arith.constant 0 : i32
    %c0_i32_1 = arith.constant 0 : i32
    return %c0_i32, %c0_i32_0 : i32, i32
  }
  func.func @transform_9(%arg0: i32, %arg1: i32) -> (i32, i32) {
    %c0_i32 = arith.constant 0 : i32
    %c0_i32_0 = arith.constant 0 : i32
    %c0_i32_1 = arith.constant 0 : i32
    return %c0_i32, %c0_i32_0 : i32, i32
  }
  func.func @transform_10(%arg0: i32, %arg1: i32) -> (i32, i32) {
    %c0_i32 = arith.constant 0 : i32
    %c0_i32_0 = arith.constant 0 : i32
    %c0_i32_1 = arith.constant 0 : i32
    return %c0_i32, %c0_i32_0 : i32, i32
  }
  func.func @transform_11(%arg0: i32, %arg1: i32) -> (i32, i32) {
    %c0_i32 = arith.constant 0 : i32
    %c0_i32_0 = arith.constant 0 : i32
    %c0_i32_1 = arith.constant 0 : i32
    return %c0_i32, %c0_i32_0 : i32, i32
  }
  func.func @transform_12(%arg0: i32, %arg1: i32) -> (i32, i32) {
    %c0_i32 = arith.constant 0 : i32
    %c0_i32_0 = arith.constant 0 : i32
    %c0_i32_1 = arith.constant 0 : i32
    return %c0_i32, %c0_i32_0 : i32, i32
  }
  func.func @transform_13(%arg0: i32, %arg1: i32) -> (i32, i32) {
    %c0_i32 = arith.constant 0 : i32
    %c0_i32_0 = arith.constant 0 : i32
    %c0_i32_1 = arith.constant 0 : i32
    return %c0_i32, %c0_i32_0 : i32, i32
  }
  func.func @transform_14(%arg0: i32, %arg1: i32) -> (i32, i32) {
    %c0_i32 = arith.constant 0 : i32
    %c0_i32_0 = arith.constant 0 : i32
    %c0_i32_1 = arith.constant 0 : i32
    return %c0_i32, %c0_i32_0 : i32, i32
  }
  func.func @transform_15(%arg0: i32, %arg1: i32) -> (i32, i32) {
    %c0_i32 = arith.constant 0 : i32
    %c0_i32_0 = arith.constant 0 : i32
    %c0_i32_1 = arith.constant 0 : i32
    return %c0_i32, %c0_i32_0 : i32, i32
  }
  func.func @transform_16(%arg0: i32, %arg1: i32) -> (i32, i32) {
    %c0_i32 = arith.constant 0 : i32
    %c0_i32_0 = arith.constant 0 : i32
    %c0_i32_1 = arith.constant 0 : i32
    return %c0_i32, %c0_i32_0 : i32, i32
  }
  func.func @transform_17(%arg0: i32, %arg1: i32) -> (i32, i32) {
    %c0_i32 = arith.constant 0 : i32
    %c0_i32_0 = arith.constant 0 : i32
    %c0_i32_1 = arith.constant 0 : i32
    return %c0_i32, %c0_i32_0 : i32, i32
  }
  func.func @transform_18(%arg0: i32, %arg1: i32) -> (i32, i32, i32) {
    %c0_i32 = arith.constant 0 : i32
    %c0_i32_0 = arith.constant 0 : i32
    return %arg0, %arg1, %c0_i32 : i32, i32, i32
  }
}

</mosaic_0001>

<llo_original>
// kernel: tpu_custom_call.1
$region0: #{tpu_custom_call.1}
  #allocation0 [shape = 'u32[]', space=smem, size = 0x4, offset = 0x4, fixed_abs, tag = 'smem constant byte address 0x4 - core index']
  #allocation1 [shape = 'u32[72,128]{1,0:T(1,128)}', space=vmem, size = 0x9000, scoped, tag = 'internal scratch']
  #allocation2 [shape = 'f32[4,8,8]{2,1,0:T(8,128)}', space=vmem, size = 0x4000, scoped, tag = 'scratch operand']
  #allocation3 [shape = 'f32[4,8,8]{2,1,0:T(8,128)}', space=vmem, size = 0x4000, scoped, tag = 'scratch operand']
  %s0 = inlined_call_operand.vmem [shape: f32[2,8,32], index: 0, kind: input, shape index: {}]
  %s1 = inlined_call_operand.vmem [shape: f32[8,8], index: 1, kind: input, shape index: {}]
  %s2 = inlined_call_operand.vmem [shape: f32[1,32], index: 2, kind: input, shape index: {}]
  %s3 = inlined_call_operand.vmem [shape: f32[1,32], index: 3, kind: input, shape index: {}]
  %s4 = inlined_call_operand.vmem [shape: f32[32,32], index: 4, kind: input, shape index: {}]
  %s5 = inlined_call_operand.vmem [shape: f32[1,32], index: 5, kind: input, shape index: {}]
  %s6 = inlined_call_operand.vmem [shape: f32[32,64], index: 6, kind: input, shape index: {}]
  %s7 = inlined_call_operand.vmem [shape: f32[1,64], index: 7, kind: input, shape index: {}]
  %s8 = inlined_call_operand.vmem [shape: f32[32,32], index: 8, kind: input, shape index: {}]
  %s9 = inlined_call_operand.vmem [shape: f32[1,32], index: 9, kind: input, shape index: {}]
  %s10 = inlined_call_operand.vmem [shape: f32[1,32], index: 10, kind: input, shape index: {}]
  %s11 = inlined_call_operand.vmem [shape: f32[1,32], index: 11, kind: input, shape index: {}]
  %s12 = inlined_call_operand.vmem [shape: f32[32,128], index: 12, kind: input, shape index: {}]
  %s13 = inlined_call_operand.vmem [shape: f32[1,128], index: 13, kind: input, shape index: {}]
  %s14 = inlined_call_operand.vmem [shape: f32[128,32], index: 14, kind: input, shape index: {}]
  %s15 = inlined_call_operand.vmem [shape: f32[1,32], index: 15, kind: input, shape index: {}]
  %s16 = inlined_call_operand.vmem [shape: f32[1,32], index: 16, kind: input, shape index: {}]
  %s17 = inlined_call_operand.vmem [shape: f32[1,32], index: 17, kind: input, shape index: {}]
  %s18 = inlined_call_operand.hbm [shape: f32[2,8,32], index: 18, kind: output, shape index: {}]
  %s19 = sld [smem:[#allocation0]]
  $region109: #{tpu_custom_call.1} parent=0
    _
  %s21 = ssub.s32 1, %s19
  %s22 = scalar_select 0, %s21, %s19
  $region1: #{tpu_custom_call.1} parent=0
    #allocation4 [shape = 'u8[8192]{0}', space=vmem, size = 0x2000, scoped, tag = 'output window, operand 0']
    #allocation5 [shape = 's32[2]{0}', space=sflag, size = 0x8, scoped, tag = 'scoped memory for tpu_custom_call.1']
    %23 = vsyncpa [#allocation5], 0
    %s24 = scalar_lea.sflag [#allocation5], 1
    %25 = vsyncpa %s24, 0
    loop: start=0, step=1, limit=4
    $region2: #{tpu_custom_call.1} parent=1 // loop_pre_header
      _
    $region3: #{tpu_custom_call.1} parent=1 // loop_header
      %s27 = sphi 0, %s31
      %p28 = scmp.ge.s32.totalorder %s27, 4
      %s34 = sphi 0, %s46
      %s35 = sphi 0, %s42
      %s36 = sphi 0, %s34
      %s37 = sphi 0, %s35
      %s38 = sphi 0, %s36
      %s39 = sphi 0, %s37
      %s49 = sphi 0, %s51
      %s52 = sphi 0, %s49
      %s53 = sphi 0, %s52
      %s69 = sphi 0, %s53
      %s73 = sphi 0, %s73
      %s75 = sphi 0, %s73
      %s76 = sphi 0, %s75
      %s90 = sphi 0, %s76
      %s94 = sphi 0, %s94
      %s96 = sphi 0, %s94
      %s97 = sphi 0, %s96
      %s111 = sphi 0, %s97
      %s115 = sphi 0, %s115
      %s117 = sphi 0, %s115
      %s118 = sphi 0, %s117
      %s132 = sphi 0, %s118
      %s136 = sphi 0, %s136
      %s138 = sphi 0, %s136
      %s139 = sphi 0, %s138
      %s153 = sphi 0, %s139
      %s157 = sphi 0, %s157
      %s159 = sphi 0, %s157
      %s160 = sphi 0, %s159
      %s174 = sphi 0, %s160
      %s178 = sphi 0, %s178
      %s180 = sphi 0, %s178
      %s181 = sphi 0, %s180
      %s195 = sphi 0, %s181
      %s199 = sphi 0, %s199
      %s201 = sphi 0, %s199
      %s202 = sphi 0, %s201
      %s216 = sphi 0, %s202
      %s220 = sphi 0, %s220
      %s222 = sphi 0, %s220
      %s223 = sphi 0, %s222
      %s237 = sphi 0, %s223
      %s241 = sphi 0, %s241
      %s243 = sphi 0, %s241
      %s244 = sphi 0, %s243
      %s258 = sphi 0, %s244
      %s262 = sphi 0, %s262
      %s264 = sphi 0, %s262
      %s265 = sphi 0, %s264
      %s279 = sphi 0, %s265
      %s283 = sphi 0, %s283
      %s285 = sphi 0, %s283
      %s286 = sphi 0, %s285
      %s300 = sphi 0, %s286
      %s304 = sphi 0, %s304
      %s306 = sphi 0, %s304
      %s307 = sphi 0, %s306
      %s321 = sphi 0, %s307
      %s325 = sphi 0, %s325
      %s327 = sphi 0, %s325
      %s328 = sphi 0, %s327
      %s342 = sphi 0, %s328
      %s346 = sphi 0, %s346
      %s348 = sphi 0, %s346
      %s349 = sphi 0, %s348
      %s363 = sphi 0, %s349
      %s367 = sphi 0, %s367
      %s369 = sphi 0, %s367
      %s370 = sphi 0, %s369
      %s384 = sphi 0, %s370
      %s388 = sphi 0, %s388
      %s390 = sphi 0, %s388
      %s391 = sphi 0, %s390
      %s405 = sphi 0, %s391
      %s409 = sphi 0, %s409
      %s411 = sphi 0, %s409
      %s412 = sphi 0, %s411
      %s426 = sphi 0, %s412
      %s434 = sphi 0, %s436
      %s437 = sphi 0, %s434
      %s438 = sphi 0, %s437
      %s454 = sphi 0, %s438
    $region4: #{tpu_custom_call.1} parent=1 // loop_header_branch
      %30 = sbr.rel (%p28) target = $region8
    $region5: #{tpu_custom_call.1} parent=1 // loop_body
      %s32 = ssub.s32 %s27, 1
      %s33 = ssub.s32 %s27, 2
      %s40 = sadd.s32 1, %s35
      %p41 = scmp.ge.s32.totalorder %s40, 1
      %s42 = scalar_select %p41, 0, %s40
      %s43 = sadd.s32 1, %s34
      %s44 = scalar_select %p41, %s43, %s34
      %p45 = scmp.ge.s32.totalorder %s44, 2
      %s46 = scalar_select %p45, 0, %s44
      %s47 = ssub.s32 %s34, %s46
      %p48 = scmp.eq.s32.totalorder %s47, 0
      %s50 = sadd.s32 %s49, 1
      %s51 = scalar_select %p48, %s49, %s50
      %p54 = pneg %p48
      %p55 = scmp.eq.s32.totalorder %s27, 1
      %p56 = por %p54, %p55
      %p57 = scmp.ne.s32.totalorder %s49, %s52
      %p58 = scmp.eq.s32.totalorder %s27, 0
      %p59 = por %p57, %p58
      %p60 = scmp.ne.s32.totalorder %s49, %s52
      %p61 = scmp.eq.s32.totalorder %s32, 1
      %p62 = por %p60, %p61
      %p63 = scmp.ne.s32.totalorder %s52, %s53
      %p64 = scmp.eq.s32.totalorder %s32, 0
      %p65 = por %p63, %p64
      %p66 = scmp.ne.s32.totalorder %s52, %s53
      %p67 = scmp.eq.s32.totalorder %s33, 1
      %p68 = por %p66, %p67
      %p70 = scmp.ne.s32.totalorder %s53, %s69
      %p71 = scmp.eq.s32.totalorder %s33, 0
      %p72 = por %p70, %p71
      %s74 = sadd.s32 %s73, 1
      %p77 = scmp.eq.s32.totalorder %s27, 1
      %p78 = scmp.ne.s32.totalorder %s73, %s75
      %p79 = scmp.eq.s32.totalorder %s27, 0
      %p80 = por %p78, %p79
      %p81 = scmp.ne.s32.totalorder %s73, %s75
      %p82 = scmp.eq.s32.totalorder %s32, 1
      %p83 = por %p81, %p82
      %p84 = scmp.ne.s32.totalorder %s75, %s76
      %p85 = scmp.eq.s32.totalorder %s32, 0
      %p86 = por %p84, %p85
      %p87 = scmp.ne.s32.totalorder %s75, %s76
      %p88 = scmp.eq.s32.totalorder %s33, 1
      %p89 = por %p87, %p88
      %p91 = scmp.ne.s32.totalorder %s76, %s90
      %p92 = scmp.eq.s32.totalorder %s33, 0
      %p93 = por %p91, %p92
      %s95 = sadd.s32 %s94, 1
      %p98 = scmp.eq.s32.totalorder %s27, 1
      %p99 = scmp.ne.s32.totalorder %s94, %s96
      %p100 = scmp.eq.s32.totalorder %s27, 0
      %p101 = por %p99, %p100
      %p102 = scmp.ne.s32.totalorder %s94, %s96
      %p103 = scmp.eq.s32.totalorder %s32, 1
      %p104 = por %p102, %p103
      %p105 = scmp.ne.s32.totalorder %s96, %s97
      %p106 = scmp.eq.s32.totalorder %s32, 0
      %p107 = por %p105, %p106
      %p108 = scmp.ne.s32.totalorder %s96, %s97
      %p109 = scmp.eq.s32.totalorder %s33, 1
      %p110 = por %p108, %p109
      %p112 = scmp.ne.s32.totalorder %s97, %s111
      %p113 = scmp.eq.s32.totalorder %s33, 0
      %p114 = por %p112, %p113
      %s116 = sadd.s32 %s115, 1
      %p119 = scmp.eq.s32.totalorder %s27, 1
      %p120 = scmp.ne.s32.totalorder %s115, %s117
      %p121 = scmp.eq.s32.totalorder %s27, 0
      %p122 = por %p120, %p121
      %p123 = scmp.ne.s32.totalorder %s115, %s117
      %p124 = scmp.eq.s32.totalorder %s32, 1
      %p125 = por %p123, %p124
      %p126 = scmp.ne.s32.totalorder %s117, %s118
      %p127 = scmp.eq.s32.totalorder %s32, 0
      %p128 = por %p126, %p127
      %p129 = scmp.ne.s32.totalorder %s117, %s118
      %p130 = scmp.eq.s32.totalorder %s33, 1
      %p131 = por %p129, %p130
      %p133 = scmp.ne.s32.totalorder %s118, %s132
      %p134 = scmp.eq.s32.totalorder %s33, 0
      %p135 = por %p133, %p134
      %s137 = sadd.s32 %s136, 1
      %p140 = scmp.eq.s32.totalorder %s27, 1
      %p141 = scmp.ne.s32.totalorder %s136, %s138
      %p142 = scmp.eq.s32.totalorder %s27, 0
      %p143 = por %p141, %p142
      %p144 = scmp.ne.s32.totalorder %s136, %s138
      %p145 = scmp.eq.s32.totalorder %s32, 1
      %p146 = por %p144, %p145
      %p147 = scmp.ne.s32.totalorder %s138, %s139
      %p148 = scmp.eq.s32.totalorder %s32, 0
      %p149 = por %p147, %p148
      %p150 = scmp.ne.s32.totalorder %s138, %s139
      %p151 = scmp.eq.s32.totalorder %s33, 1
      %p152 = por %p150, %p151
      %p154 = scmp.ne.s32.totalorder %s139, %s153
      %p155 = scmp.eq.s32.totalorder %s33, 0
      %p156 = por %p154, %p155
      %s158 = sadd.s32 %s157, 1
      %p161 = scmp.eq.s32.totalorder %s27, 1
      %p162 = scmp.ne.s32.totalorder %s157, %s159
      %p163 = scmp.eq.s32.totalorder %s27, 0
      %p164 = por %p162, %p163
      %p165 = scmp.ne.s32.totalorder %s157, %s159
      %p166 = scmp.eq.s32.totalorder %s32, 1
      %p167 = por %p165, %p166
      %p168 = scmp.ne.s32.totalorder %s159, %s160
      %p169 = scmp.eq.s32.totalorder %s32, 0
      %p170 = por %p168, %p169
      %p171 = scmp.ne.s32.totalorder %s159, %s160
      %p172 = scmp.eq.s32.totalorder %s33, 1
      %p173 = por %p171, %p172
      %p175 = scmp.ne.s32.totalorder %s160, %s174
      %p176 = scmp.eq.s32.totalorder %s33, 0
      %p177 = por %p175, %p176
      %s179 = sadd.s32 %s178, 1
      %p182 = scmp.eq.s32.totalorder %s27, 1
      %p183 = scmp.ne.s32.totalorder %s178, %s180
      %p184 = scmp.eq.s32.totalorder %s27, 0
      %p185 = por %p183, %p184
      %p186 = scmp.ne.s32.totalorder %s178, %s180
      %p187 = scmp.eq.s32.totalorder %s32, 1
      %p188 = por %p186, %p187
      %p189 = scmp.ne.s32.totalorder %s180, %s181
      %p190 = scmp.eq.s32.totalorder %s32, 0
      %p191 = por %p189, %p190
      %p192 = scmp.ne.s32.totalorder %s180, %s181
      %p193 = scmp.eq.s32.totalorder %s33, 1
      %p194 = por %p192, %p193
      %p196 = scmp.ne.s32.totalorder %s181, %s195
      %p197 = scmp.eq.s32.totalorder %s33, 0
      %p198 = por %p196, %p197
      %s200 = sadd.s32 %s199, 1
      %p203 = scmp.eq.s32.totalorder %s27, 1
      %p204 = scmp.ne.s32.totalorder %s199, %s201
      %p205 = scmp.eq.s32.totalorder %s27, 0
      %p206 = por %p204, %p205
      %p207 = scmp.ne.s32.totalorder %s199, %s201
      %p208 = scmp.eq.s32.totalorder %s32, 1
      %p209 = por %p207, %p208
      %p210 = scmp.ne.s32.totalorder %s201, %s202
      %p211 = scmp.eq.s32.totalorder %s32, 0
      %p212 = por %p210, %p211
      %p213 = scmp.ne.s32.totalorder %s201, %s202
      %p214 = scmp.eq.s32.totalorder %s33, 1
      %p215 = por %p213, %p214
      %p217 = scmp.ne.s32.totalorder %s202, %s216
      %p218 = scmp.eq.s32.totalorder %s33, 0
      %p219 = por %p217, %p218
      %s221 = sadd.s32 %s220, 1
      %p224 = scmp.eq.s32.totalorder %s27, 1
      %p225 = scmp.ne.s32.totalorder %s220, %s222
      %p226 = scmp.eq.s32.totalorder %s27, 0
      %p227 = por %p225, %p226
      %p228 = scmp.ne.s32.totalorder %s220, %s222
      %p229 = scmp.eq.s32.totalorder %s32, 1
      %p230 = por %p228, %p229
      %p231 = scmp.ne.s32.totalorder %s222, %s223
      %p232 = scmp.eq.s32.totalorder %s32, 0
      %p233 = por %p231, %p232
      %p234 = scmp.ne.s32.totalorder %s222, %s223
      %p235 = scmp.eq.s32.totalorder %s33, 1
      %p236 = por %p234, %p235
      %p238 = scmp.ne.s32.totalorder %s223, %s237
      %p239 = scmp.eq.s32.totalorder %s33, 0
      %p240 = por %p238, %p239
      %s242 = sadd.s32 %s241, 1
      %p245 = scmp.eq.s32.totalorder %s27, 1
      %p246 = scmp.ne.s32.totalorder %s241, %s243
      %p247 = scmp.eq.s32.totalorder %s27, 0
      %p248 = por %p246, %p247
      %p249 = scmp.ne.s32.totalorder %s241, %s243
      %p250 = scmp.eq.s32.totalorder %s32, 1
      %p251 = por %p249, %p250
      %p252 = scmp.ne.s32.totalorder %s243, %s244
      %p253 = scmp.eq.s32.totalorder %s32, 0
      %p254 = por %p252, %p253
      %p255 = scmp.ne.s32.totalorder %s243, %s244
      %p256 = scmp.eq.s32.totalorder %s33, 1
      %p257 = por %p255, %p256
      %p259 = scmp.ne.s32.totalorder %s244, %s258
      %p260 = scmp.eq.s32.totalorder %s33, 0
      %p261 = por %p259, %p260
      %s263 = sadd.s32 %s262, 1
      %p266 = scmp.eq.s32.totalorder %s27, 1
      %p267 = scmp.ne.s32.totalorder %s262, %s264
      %p268 = scmp.eq.s32.totalorder %s27, 0
      %p269 = por %p267, %p268
      %p270 = scmp.ne.s32.totalorder %s262, %s264
      %p271 = scmp.eq.s32.totalorder %s32, 1
      %p272 = por %p270, %p271
      %p273 = scmp.ne.s32.totalorder %s264, %s265
      %p274 = scmp.eq.s32.totalorder %s32, 0
      %p275 = por %p273, %p274
      %p276 = scmp.ne.s32.totalorder %s264, %s265
      %p277 = scmp.eq.s32.totalorder %s33, 1
      %p278 = por %p276, %p277
      %p280 = scmp.ne.s32.totalorder %s265, %s279
      %p281 = scmp.eq.s32.totalorder %s33, 0
      %p282 = por %p280, %p281
      %s284 = sadd.s32 %s283, 1
      %p287 = scmp.eq.s32.totalorder %s27, 1
      %p288 = scmp.ne.s32.totalorder %s283, %s285
      %p289 = scmp.eq.s32.totalorder %s27, 0
      %p290 = por %p288, %p289
      %p291 = scmp.ne.s32.totalorder %s283, %s285
      %p292 = scmp.eq.s32.totalorder %s32, 1
      %p293 = por %p291, %p292
      %p294 = scmp.ne.s32.totalorder %s285, %s286
      %p295 = scmp.eq.s32.totalorder %s32, 0
      %p296 = por %p294, %p295
      %p297 = scmp.ne.s32.totalorder %s285, %s286
      %p298 = scmp.eq.s32.totalorder %s33, 1
      %p299 = por %p297, %p298
      %p301 = scmp.ne.s32.totalorder %s286, %s300
      %p302 = scmp.eq.s32.totalorder %s33, 0
      %p303 = por %p301, %p302
      %s305 = sadd.s32 %s304, 1
      %p308 = scmp.eq.s32.totalorder %s27, 1
      %p309 = scmp.ne.s32.totalorder %s304, %s306
      %p310 = scmp.eq.s32.totalorder %s27, 0
      %p311 = por %p309, %p310
      %p312 = scmp.ne.s32.totalorder %s304, %s306
      %p313 = scmp.eq.s32.totalorder %s32, 1
      %p314 = por %p312, %p313
      %p315 = scmp.ne.s32.totalorder %s306, %s307
      %p316 = scmp.eq.s32.totalorder %s32, 0
      %p317 = por %p315, %p316
      %p318 = scmp.ne.s32.totalorder %s306, %s307
      %p319 = scmp.eq.s32.totalorder %s33, 1
      %p320 = por %p318, %p319
      %p322 = scmp.ne.s32.totalorder %s307, %s321
      %p323 = scmp.eq.s32.totalorder %s33, 0
      %p324 = por %p322, %p323
      %s326 = sadd.s32 %s325, 1
      %p329 = scmp.eq.s32.totalorder %s27, 1
      %p330 = scmp.ne.s32.totalorder %s325, %s327
      %p331 = scmp.eq.s32.totalorder %s27, 0
      %p332 = por %p330, %p331
      %p333 = scmp.ne.s32.totalorder %s325, %s327
      %p334 = scmp.eq.s32.totalorder %s32, 1
      %p335 = por %p333, %p334
      %p336 = scmp.ne.s32.totalorder %s327, %s328
      %p337 = scmp.eq.s32.totalorder %s32, 0
      %p338 = por %p336, %p337
      %p339 = scmp.ne.s32.totalorder %s327, %s328
      %p340 = scmp.eq.s32.totalorder %s33, 1
      %p341 = por %p339, %p340
      %p343 = scmp.ne.s32.totalorder %s328, %s342
      %p344 = scmp.eq.s32.totalorder %s33, 0
      %p345 = por %p343, %p344
      %s347 = sadd.s32 %s346, 1
      %p350 = scmp.eq.s32.totalorder %s27, 1
      %p351 = scmp.ne.s32.totalorder %s346, %s348
      %p352 = scmp.eq.s32.totalorder %s27, 0
      %p353 = por %p351, %p352
      %p354 = scmp.ne.s32.totalorder %s346, %s348
      %p355 = scmp.eq.s32.totalorder %s32, 1
      %p356 = por %p354, %p355
      %p357 = scmp.ne.s32.totalorder %s348, %s349
      %p358 = scmp.eq.s32.totalorder %s32, 0
      %p359 = por %p357, %p358
      %p360 = scmp.ne.s32.totalorder %s348, %s349
      %p361 = scmp.eq.s32.totalorder %s33, 1
      %p362 = por %p360, %p361
      %p364 = scmp.ne.s32.totalorder %s349, %s363
      %p365 = scmp.eq.s32.totalorder %s33, 0
      %p366 = por %p364, %p365
      %s368 = sadd.s32 %s367, 1
      %p371 = scmp.eq.s32.totalorder %s27, 1
      %p372 = scmp.ne.s32.totalorder %s367, %s369
      %p373 = scmp.eq.s32.totalorder %s27, 0
      %p374 = por %p372, %p373
      %p375 = scmp.ne.s32.totalorder %s367, %s369
      %p376 = scmp.eq.s32.totalorder %s32, 1
      %p377 = por %p375, %p376
      %p378 = scmp.ne.s32.totalorder %s369, %s370
      %p379 = scmp.eq.s32.totalorder %s32, 0
      %p380 = por %p378, %p379
      %p381 = scmp.ne.s32.totalorder %s369, %s370
      %p382 = scmp.eq.s32.totalorder %s33, 1
      %p383 = por %p381, %p382
      %p385 = scmp.ne.s32.totalorder %s370, %s384
      %p386 = scmp.eq.s32.totalorder %s33, 0
      %p387 = por %p385, %p386
      %s389 = sadd.s32 %s388, 1
      %p392 = scmp.eq.s32.totalorder %s27, 1
      %p393 = scmp.ne.s32.totalorder %s388, %s390
      %p394 = scmp.eq.s32.totalorder %s27, 0
      %p395 = por %p393, %p394
      %p396 = scmp.ne.s32.totalorder %s388, %s390
      %p397 = scmp.eq.s32.totalorder %s32, 1
      %p398 = por %p396, %p397
      %p399 = scmp.ne.s32.totalorder %s390, %s391
      %p400 = scmp.eq.s32.totalorder %s32, 0
      %p401 = por %p399, %p400
      %p402 = scmp.ne.s32.totalorder %s390, %s391
      %p403 = scmp.eq.s32.totalorder %s33, 1
      %p404 = por %p402, %p403
      %p406 = scmp.ne.s32.totalorder %s391, %s405
      %p407 = scmp.eq.s32.totalorder %s33, 0
      %p408 = por %p406, %p407
      %s410 = sadd.s32 %s409, 1
      %p413 = scmp.eq.s32.totalorder %s27, 1
      %p414 = scmp.ne.s32.totalorder %s409, %s411
      %p415 = scmp.eq.s32.totalorder %s27, 0
      %p416 = por %p414, %p415
      %p417 = scmp.ne.s32.totalorder %s409, %s411
      %p418 = scmp.eq.s32.totalorder %s32, 1
      %p419 = por %p417, %p418
      %p420 = scmp.ne.s32.totalorder %s411, %s412
      %p421 = scmp.eq.s32.totalorder %s32, 0
      %p422 = por %p420, %p421
      %p423 = scmp.ne.s32.totalorder %s411, %s412
      %p424 = scmp.eq.s32.totalorder %s33, 1
      %p425 = por %p423, %p424
      %p427 = scmp.ne.s32.totalorder %s412, %s426
      %p428 = scmp.eq.s32.totalorder %s33, 0
      %p429 = por %p427, %p428
      %s430 = ssub.s32 %s34, %s46
      %s431 = ssub.s32 %s35, %s42
      %s432 = sor.u32 %s430, %s431
      %p433 = scmp.eq.s32.totalorder %s432, 0
      %s435 = sadd.s32 %s434, 1
      %s436 = scalar_select %p433, %s434, %s435
      %p439 = pneg %p433
      %p440 = scmp.eq.s32.totalorder %s27, 1
      %p441 = por %p439, %p440
      %p442 = scmp.ne.s32.totalorder %s434, %s437
      %p443 = scmp.eq.s32.totalorder %s27, 0
      %p444 = por %p442, %p443
      %p445 = scmp.ne.s32.totalorder %s434, %s437
      %p446 = scmp.eq.s32.totalorder %s32, 1
      %p447 = por %p445, %p446
      %p448 = scmp.ne.s32.totalorder %s437, %s438
      %p449 = scmp.eq.s32.totalorder %s32, 0
      %p450 = por %p448, %p449
      %p451 = scmp.ne.s32.totalorder %s437, %s438
      %p452 = scmp.eq.s32.totalorder %s33, 1
      %p453 = por %p451, %p452
      %p455 = scmp.ne.s32.totalorder %s438, %s454
      %p456 = scmp.eq.s32.totalorder %s33, 0
      %p457 = por %p455, %p456
      %p458 = scmp.le.s32.totalorder 1, %s27
      %p459 = scmp.lt.s32.totalorder %s27, 3
      %p460 = pnand %p458, %p459
      %p461 = pneg %p460
      // Predicated region
      $region9: #{tpu_custom_call.1} parent=5 // pred_check
        _
      $region10: #{tpu_custom_call.1} parent=5 // pred_check_branch
        %463 = sbr.rel (%p460) target = $region12
      $region11: #{tpu_custom_call.1} parent=5 // pred_region
        %s464 = ssub.s32 %s27, 1
        // Predicated region
        $region13: #{tpu_custom_call.1} parent=11 // pred_check
          %p465 = pneg %p86
        $region14: #{tpu_custom_call.1} parent=11 // pred_check_branch
          %467 = sbr.rel (%p465) target = $region16
        $region15: #{tpu_custom_call.1} parent=11 // pred_region
          _
        $region16: #{tpu_custom_call.1} parent=11 // pred_fallthru
          _
        // Predicated region
        $region17: #{tpu_custom_call.1} parent=11 // pred_check
          %p468 = pneg %p107
        $region18: #{tpu_custom_call.1} parent=11 // pred_check_branch
          %470 = sbr.rel (%p468) target = $region20
        $region19: #{tpu_custom_call.1} parent=11 // pred_region
          _
        $region20: #{tpu_custom_call.1} parent=11 // pred_fallthru
          _
        // Predicated region
        $region21: #{tpu_custom_call.1} parent=11 // pred_check
          %p471 = pneg %p128
        $region22: #{tpu_custom_call.1} parent=11 // pred_check_branch
          %473 = sbr.rel (%p471) target = $region24
        $region23: #{tpu_custom_call.1} parent=11 // pred_region
          _
        $region24: #{tpu_custom_call.1} parent=11 // pred_fallthru
          _
        // Predicated region
        $region25: #{tpu_custom_call.1} parent=11 // pred_check
          %p474 = pneg %p149
        $region26: #{tpu_custom_call.1} parent=11 // pred_check_branch
          %476 = sbr.rel (%p474) target = $region28
        $region27: #{tpu_custom_call.1} parent=11 // pred_region
          _
        $region28: #{tpu_custom_call.1} parent=11 // pred_fallthru
          _
        // Predicated region
        $region29: #{tpu_custom_call.1} parent=11 // pred_check
          %p477 = pneg %p170
        $region30: #{tpu_custom_call.1} parent=11 // pred_check_branch
          %479 = sbr.rel (%p477) target = $region32
        $region31: #{tpu_custom_call.1} parent=11 // pred_region
          _
        $region32: #{tpu_custom_call.1} parent=11 // pred_fallthru
          _
        // Predicated region
        $region33: #{tpu_custom_call.1} parent=11 // pred_check
          %p480 = pneg %p191
        $region34: #{tpu_custom_call.1} parent=11 // pred_check_branch
          %482 = sbr.rel (%p480) target = $region36
        $region35: #{tpu_custom_call.1} parent=11 // pred_region
          _
        $region36: #{tpu_custom_call.1} parent=11 // pred_fallthru
          _
        // Predicated region
        $region37: #{tpu_custom_call.1} parent=11 // pred_check
          %p483 = pneg %p212
        $region38: #{tpu_custom_call.1} parent=11 // pred_check_branch
          %485 = sbr.rel (%p483) target = $region40
        $region39: #{tpu_custom_call.1} parent=11 // pred_region
          _
        $region40: #{tpu_custom_call.1} parent=11 // pred_fallthru
          _
        // Predicated region
        $region41: #{tpu_custom_call.1} parent=11 // pred_check
          %p486 = pneg %p233
        $region42: #{tpu_custom_call.1} parent=11 // pred_check_branch
          %488 = sbr.rel (%p486) target = $region44
        $region43: #{tpu_custom_call.1} parent=11 // pred_region
          _
        $region44: #{tpu_custom_call.1} parent=11 // pred_fallthru
          _
        // Predicated region
        $region45: #{tpu_custom_call.1} parent=11 // pred_check
          %p489 = pneg %p254
        $region46: #{tpu_custom_call.1} parent=11 // pred_check_branch
          %491 = sbr.rel (%p489) target = $region48
        $region47: #{tpu_custom_call.1} parent=11 // pred_region
          _
        $region48: #{tpu_custom_call.1} parent=11 // pred_fallthru
          _
        // Predicated region
        $region49: #{tpu_custom_call.1} parent=11 // pred_check
          %p492 = pneg %p275
        $region50: #{tpu_custom_call.1} parent=11 // pred_check_branch
          %494 = sbr.rel (%p492) target = $region52
        $region51: #{tpu_custom_call.1} parent=11 // pred_region
          _
        $region52: #{tpu_custom_call.1} parent=11 // pred_fallthru
          _
        // Predicated region
        $region53: #{tpu_custom_call.1} parent=11 // pred_check
          %p495 = pneg %p296
        $region54: #{tpu_custom_call.1} parent=11 // pred_check_branch
          %497 = sbr.rel (%p495) target = $region56
        $region55: #{tpu_custom_call.1} parent=11 // pred_region
          _
        $region56: #{tpu_custom_call.1} parent=11 // pred_fallthru
          _
        // Predicated region
        $region57: #{tpu_custom_call.1} parent=11 // pred_check
          %p498 = pneg %p317
        $region58: #{tpu_custom_call.1} parent=11 // pred_check_branch
          %500 = sbr.rel (%p498) target = $region60
        $region59: #{tpu_custom_call.1} parent=11 // pred_region
          _
        $region60: #{tpu_custom_call.1} parent=11 // pred_fallthru
          _
        // Predicated region
        $region61: #{tpu_custom_call.1} parent=11 // pred_check
          %p501 = pneg %p338
        $region62: #{tpu_custom_call.1} parent=11 // pred_check_branch
          %503 = sbr.rel (%p501) target = $region64
        $region63: #{tpu_custom_call.1} parent=11 // pred_region
          _
        $region64: #{tpu_custom_call.1} parent=11 // pred_fallthru
          _
        // Predicated region
        $region65: #{tpu_custom_call.1} parent=11 // pred_check
          %p504 = pneg %p359
        $region66: #{tpu_custom_call.1} parent=11 // pred_check_branch
          %506 = sbr.rel (%p504) target = $region68
        $region67: #{tpu_custom_call.1} parent=11 // pred_region
          _
        $region68: #{tpu_custom_call.1} parent=11 // pred_fallthru
          _
        // Predicated region
        $region69: #{tpu_custom_call.1} parent=11 // pred_check
          %p507 = pneg %p380
        $region70: #{tpu_custom_call.1} parent=11 // pred_check_branch
          %509 = sbr.rel (%p507) target = $region72
        $region71: #{tpu_custom_call.1} parent=11 // pred_region
          _
        $region72: #{tpu_custom_call.1} parent=11 // pred_fallthru
          _
        // Predicated region
        $region73: #{tpu_custom_call.1} parent=11 // pred_check
          %p510 = pneg %p401
        $region74: #{tpu_custom_call.1} parent=11 // pred_check_branch
          %512 = sbr.rel (%p510) target = $region76
        $region75: #{tpu_custom_call.1} parent=11 // pred_region
          _
        $region76: #{tpu_custom_call.1} parent=11 // pred_fallthru
          _
        // Predicated region
        $region77: #{tpu_custom_call.1} parent=11 // pred_check
          %p513 = pneg %p422
        $region78: #{tpu_custom_call.1} parent=11 // pred_check_branch
          %515 = sbr.rel (%p513) target = $region80
        $region79: #{tpu_custom_call.1} parent=11 // pred_region
          _
        $region80: #{tpu_custom_call.1} parent=11 // pred_fallthru
          _
      $region12: #{tpu_custom_call.1} parent=5 // pred_fallthru
        _
      %p516 = scmp.lt.s32.totalorder %s27, 2
      // Predicated region
      $region81: #{tpu_custom_call.1} parent=5 // pred_check
        %p517 = pneg %p516
      $region82: #{tpu_custom_call.1} parent=5 // pred_check_branch
        %519 = sbr.rel (%p517) target = $region84
      $region83: #{tpu_custom_call.1} parent=5 // pred_region
        // Predicated region
        $region85: #{tpu_custom_call.1} parent=83 // pred_check
          %p520 = pneg %p59
        $region86: #{tpu_custom_call.1} parent=83 // pred_check_branch
          %522 = sbr.rel (%p520) target = $region88
        $region87: #{tpu_custom_call.1} parent=83 // pred_region
          %p523 = scmp.lt.s32.totalorder %s34, 1
          %s524 = scalar_select %p523, %s34, 1
          %s525 = smul.addr %s524, 8
          %s526 = scalar_lea.vmem %s0, %s525
        $region88: #{tpu_custom_call.1} parent=83 // pred_fallthru
          _
      $region84: #{tpu_custom_call.1} parent=5 // pred_fallthru
        _
      %p527 = scmp.le.s32.totalorder 1, %s27
      %p528 = scmp.lt.s32.totalorder %s27, 3
      %p529 = pnand %p527, %p528
      %p530 = pneg %p529
      // Predicated region
      $region89: #{tpu_custom_call.1} parent=5 // pred_check
        _
      $region90: #{tpu_custom_call.1} parent=5 // pred_check_branch
        %532 = sbr.rel (%p529) target = $region92
      $region91: #{tpu_custom_call.1} parent=5 // pred_region
        %s533 = ssub.s32 %s27, 1
        %p534 = scmp.lt.s32.totalorder %s36, 1
        %s535 = scalar_select %p534, %s36, 1
        %s536 = smul.addr %s535, 8
        %s537 = scalar_lea.vmem %s0, %s536
        %p538 = pneg %p65
        %p539 = pneg %p62
        %p540 = pneg %p86
        %p541 = pneg %p83
        %p542 = pneg %p107
        %p543 = pneg %p104
        %p544 = pneg %p128
        %p545 = pneg %p125
        %p546 = pneg %p149
        %p547 = pneg %p146
        %p548 = pneg %p170
        %p549 = pneg %p167
        %p550 = pneg %p191
        %p551 = pneg %p188
        %p552 = pneg %p212
        %p553 = pneg %p209
        %p554 = pneg %p233
        %p555 = pneg %p230
        %p556 = pneg %p254
        %p557 = pneg %p251
        %p558 = pneg %p275
        %p559 = pneg %p272
        %p560 = pneg %p296
        %p561 = pneg %p293
        %p562 = pneg %p317
        %p563 = pneg %p314
        %p564 = pneg %p338
        %p565 = pneg %p335
        %p566 = pneg %p359
        %p567 = pneg %p356
        %p568 = pneg %p380
        %p569 = pneg %p377
        %p570 = pneg %p401
        %p571 = pneg %p398
        %p572 = pneg %p422
        %p573 = pneg %p419
        %p574 = pneg %p450
        %p575 = pneg %p447
        %s576 = sand.u32 %s437, 1
        %s577 = scalar_lea.sflag [#allocation5], %s576
        %s578 = sand.u32 %s437, 1
        %s579 = smul.addr %s578, 8
        %s580 = scalar_lea.vmem [#allocation4], %s579
        %p581 = scmp.lt.s32.totalorder %s36, 1
        %s582 = scalar_select %p581, %s36, 1
        %s583 = smul.addr %s582, 8
        %s584 = scalar_lea.vmem %s0, %s583
        %p585 = scmp.eq.s32.totalorder %s37, 0
        // Predicated region
        $region93: #{tpu_custom_call.1} parent=91 // pred_check
          %p586 = pneg %p585
        $region94: #{tpu_custom_call.1} parent=91 // pred_check_branch
          %588 = sbr.rel (%p586) target = $region96
        $region95: #{tpu_custom_call.1} parent=91 // pred_region
          %v589 = vld [vmem:[%s584] sm:$0xff]
          %v590 = vld [vmem:[%s2] sm:$0x1]
          %v591 = vld [vmem:[%s3] sm:$0x1]
          %vm592 = vcmask 261120
          %v593 = vsel %vm592, %v589, 0.0
          %594 = vadd.xlane.f32.xlu0 %v593
          %v595 = vpop.xlane.xlu0 %594
          %v596 = vrcp.pop 32.0
          %v597 = vmul.f32 32.0, %v596
          %v598 = vsub.f32 1.0, %v597
          %v599 = vmul.f32 %v596, %v598
          %v600 = vadd.f32 %v596, %v599
          %vm601 = vweird.f32 %v596
          %v602 = vsel %vm601, %v596, %v600
          %v603 = vmul.f32 %v595, %v602
          %v604 = vsub.f32 %v589, %v603
          %v605 = vmul.f32 %v604, %v604
          %v606 = vsel %vm592, %v605, 0.0
          %607 = vadd.xlane.f32.xlu0 %v606
          %v608 = vpop.xlane.xlu0 %607
          %v609 = vmul.f32 %v608, %v602
          %v610 = vadd.f32 %v609, 1e-05
          %v611 = vrsqrt.pop %v610
          %v612 = vmul.f32 %v611, %v610
          %v613 = vmul.f32 %v612, %v611
          %v614 = vmul.f32 0.5, %v613
          %v615 = vsub.f32 1.5, %v614
          %v616 = vmul.f32 %v611, %v615
          %vm617 = vweird.f32 %v610
          %vm618 = vweird.f32 %v611
          %vm619 = vmor %vm617, %vm618
          %v620 = vsel %vm619, %v611, %v616
          %v621 = vmul.f32 %v604, %v620
          %v623 = vperm.slane %v590, 0
          %v625 = vmul.f32 %v621, %v623
          %v627 = vperm.slane %v591, 0
          %v629 = vadd.f32 %v625, %v627
          %v630 = vld [vmem:[%s6] sm:$0xff]
          %v631 = vld [vmem:[%s6 + $0x8] sm:$0xff]
          %v632 = vld [vmem:[%s6 + $0x10] sm:$0xff]
          %v633 = vld [vmem:[%s6 + $0x18] sm:$0xff]
          %v634 = vld [vmem:[%s7] sm:$0x1]
          %v636 = vperm.slane %v634, 0
          %v639 = vsel %vm592, %v629, 0
          %641 = vmatpush.msra.mxu0 0.0
          %642 = vmatpush.msra.mxu0 0.0
          %643 = vmatpush.msra.mxu0 0.0
          %644 = vmatpush.msra.mxu0 0.0
          %645 = vmatpush.msra.mxu0 0.0
          %646 = vmatpush.msra.mxu0 0.0
          %647 = vmatpush.msra.mxu0 0.0
          %648 = vmatpush.msra.mxu0 0.0
          %649 = vmatpush.msra.mxu0 0.0
          %650 = vmatpush.msra.mxu0 0.0
          %651 = vmatpush.msra.mxu0 0.0
          %652 = vmatpush.msra.mxu0 0.0
          %653 = vmatpush.msra.mxu0 %v633
          %654 = vmatpush.msra.mxu0 %v632
          %655 = vmatpush.msra.mxu0 %v631
          %656 = vmatpush.msra.mxu0 %v630
          %657 = vmatmul.f32.gmra.mxu0 %v639
          %v658 = vpop.f32.mrf.mxu0
          %v659 = vadd.f32 %v636, %v658
          %660 = vdwg.mxu0
          %662 = vrot.lane.b32.xlu0 %v659, 120
          %v663 = vpop.permute.xlu0 %662
          %665 = vrot.lane.b32.xlu0 %v659, 112
          %v666 = vpop.permute.xlu0 %665
          %668 = vrot.lane.b32.xlu0 %v659, 104
          %v669 = vpop.permute.xlu0 %668
          %v671 = vld [vmem:[%s1] sm:$0xff]
          %v672 = vadd.f32 %v659, %v671
          %v673 = vadd.f32 %v663, %v671
          %v674 = vadd.f32 %v666, %v671
          %v675 = vadd.f32 %v669, %v671
          %vm676 = vcmask 64512
          %677 = vst.msk [vmem:[#allocation2] sm:$0xff] %vm676, %v672
          %678 = vst.msk [vmem:[#allocation2 + $0x8] sm:$0xff] %vm676, %v673
          %679 = vst.msk [vmem:[#allocation2 + $0x10] sm:$0xff] %vm676, %v674
          %680 = vst.msk [vmem:[#allocation2 + $0x18] sm:$0xff] %vm676, %v675
          %681 = vrot.lane.b32.xlu0 %v659, 96
          %v682 = vpop.permute.xlu0 %681
          %683 = vrot.lane.b32.xlu0 %v663, 96
          %v684 = vpop.permute.xlu0 %683
          %685 = vrot.lane.b32.xlu0 %v666, 96
          %v686 = vpop.permute.xlu0 %685
          %687 = vrot.lane.b32.xlu0 %v669, 96
          %v688 = vpop.permute.xlu0 %687
          %693 = vst.msk [vmem:[#allocation3] sm:$0xff] %vm676, %v682
          %694 = vst.msk [vmem:[#allocation3 + $0x8] sm:$0xff] %vm676, %v684
          %695 = vst.msk [vmem:[#allocation3 + $0x10] sm:$0xff] %vm676, %v686
          %696 = vst.msk [vmem:[#allocation3 + $0x18] sm:$0xff] %vm676, %v688
        $region96: #{tpu_custom_call.1} parent=91 // pred_fallthru
          _
        %s697 = smul.u32 %s37, 8
        %s698 = scalar_lea.vmem %s584, %s697
        %v699 = vld [vmem:[%s698] sm:$0xff]
        %v700 = vld [vmem:[%s2] sm:$0x1]
        %v701 = vld [vmem:[%s3] sm:$0x1]
        %vm702 = vcmask 261120
        %v703 = vsel %vm702, %v699, 0.0
        %704 = vadd.xlane.f32.xlu0 %v703
        %v705 = vpop.xlane.xlu0 %704
        %v706 = vrcp.pop 32.0
        %v707 = vmul.f32 32.0, %v706
        %v708 = vsub.f32 1.0, %v707
        %v709 = vmul.f32 %v706, %v708
        %v710 = vadd.f32 %v706, %v709
        %vm711 = vweird.f32 %v706
        %v712 = vsel %vm711, %v706, %v710
        %v713 = vmul.f32 %v705, %v712
        %v714 = vsub.f32 %v699, %v713
        %v715 = vmul.f32 %v714, %v714
        %v716 = vsel %vm702, %v715, 0.0
        %717 = vadd.xlane.f32.xlu0 %v716
        %v718 = vpop.xlane.xlu0 %717
        %v719 = vmul.f32 %v718, %v712
        %v720 = vadd.f32 %v719, 1e-05
        %v721 = vrsqrt.pop %v720
        %v722 = vmul.f32 %v721, %v720
        %v723 = vmul.f32 %v722, %v721
        %v724 = vmul.f32 0.5, %v723
        %v725 = vsub.f32 1.5, %v724
        %v726 = vmul.f32 %v721, %v725
        %vm727 = vweird.f32 %v720
        %vm728 = vweird.f32 %v721
        %vm729 = vmor %vm727, %vm728
        %v730 = vsel %vm729, %v721, %v726
        %v731 = vmul.f32 %v714, %v730
        %v733 = vperm.slane %v700, 0
        %v735 = vmul.f32 %v731, %v733
        %v737 = vperm.slane %v701, 0
        %v739 = vadd.f32 %v735, %v737
        %v740 = vld [vmem:[%s4] sm:$0xff]
        %v741 = vld [vmem:[%s4 + $0x8] sm:$0xff]
        %v742 = vld [vmem:[%s4 + $0x10] sm:$0xff]
        %v743 = vld [vmem:[%s4 + $0x18] sm:$0xff]
        %v744 = vld [vmem:[%s5] sm:$0x1]
        %v746 = vperm.slane %v744, 0
        %v749 = vsel %vm702, %v739, 0
        %751 = vmatpush.msra.mxu0 0.0
        %752 = vmatpush.msra.mxu0 0.0
        %753 = vmatpush.msra.mxu0 0.0
        %754 = vmatpush.msra.mxu0 0.0
        %755 = vmatpush.msra.mxu0 0.0
        %756 = vmatpush.msra.mxu0 0.0
        %757 = vmatpush.msra.mxu0 0.0
        %758 = vmatpush.msra.mxu0 0.0
        %759 = vmatpush.msra.mxu0 0.0
        %760 = vmatpush.msra.mxu0 0.0
        %761 = vmatpush.msra.mxu0 0.0
        %762 = vmatpush.msra.mxu0 0.0
        %763 = vmatpush.msra.mxu0 %v743
        %764 = vmatpush.msra.mxu0 %v742
        %765 = vmatpush.msra.mxu0 %v741
        %766 = vmatpush.msra.mxu0 %v740
        %767 = vmatmul.f32.gmra.mxu0 %v749
        %v768 = vpop.f32.mrf.mxu0
        %v769 = vadd.f32 %v746, %v768
        %770 = vdwg.mxu0
        %772 = vrot.lane.b32.xlu0 %v769, 120
        %v773 = vpop.permute.xlu0 %772
        %775 = vrot.lane.b32.xlu0 %v769, 112
        %v776 = vpop.permute.xlu0 %775
        %778 = vrot.lane.b32.xlu0 %v769, 104
        %v779 = vpop.permute.xlu0 %778
        %s781 = scalar_lea.vmem %s1, %s697
        %v782 = vld [vmem:[%s781] sm:$0xff]
        %v783 = vadd.f32 %v769, %v782
        %v784 = vadd.f32 %v773, %v782
        %v785 = vadd.f32 %v776, %v782
        %v786 = vadd.f32 %v779, %v782
        %v787 = vmul.f32 %v783, 0.35355338
        %v788 = vmul.f32 %v784, 0.35355338
        %v789 = vmul.f32 %v785, 0.35355338
        %v790 = vmul.f32 %v786, 0.35355338
        %v791 = vld [vmem:[#allocation2] sm:$0xff]
        %v792 = vld [vmem:[#allocation2 + $0x8] sm:$0xff]
        %v793 = vld [vmem:[#allocation2 + $0x10] sm:$0xff]
        %v794 = vld [vmem:[#allocation2 + $0x18] sm:$0xff]
        %v795 = vld [vmem:[#allocation3] sm:$0xff]
        %v796 = vld [vmem:[#allocation3 + $0x8] sm:$0xff]
        %v797 = vld [vmem:[#allocation3 + $0x10] sm:$0xff]
        %v798 = vld [vmem:[#allocation3 + $0x18] sm:$0xff]
        %vm799 = vcmask 64512
        %v801 = vsel %vm799, %v787, 0
        %v804 = vsel %vm799, %v791, 0
        %806 = vmatpush.xpose.msra.mxu0 0.0
        %807 = vmatpush.xpose.msra.mxu0 0.0
        %808 = vmatpush.xpose.msra.mxu0 0.0
        %809 = vmatpush.xpose.msra.mxu0 0.0
        %810 = vmatpush.xpose.msra.mxu0 0.0
        %811 = vmatpush.xpose.msra.mxu0 0.0
        %812 = vmatpush.xpose.msra.mxu0 0.0
        %813 = vmatpush.xpose.msra.mxu0 0.0
        %814 = vmatpush.xpose.msra.mxu0 0.0
        %815 = vmatpush.xpose.msra.mxu0 0.0
        %816 = vmatpush.xpose.msra.mxu0 0.0
        %817 = vmatpush.xpose.msra.mxu0 0.0
        %818 = vmatpush.xpose.msra.mxu0 0.0
        %819 = vmatpush.xpose.msra.mxu0 0.0
        %820 = vmatpush.xpose.msra.mxu0 0.0
        %821 = vmatpush.xpose.msra.mxu0 %v804
        %822 = vmatmul.f32.gmra.mxu0 %v801
        %v823 = vpop.f32.mrf.mxu0
        %v824 = vadd.f32 0.0, %v823
        %825 = vdwg.mxu0
        %v827 = vsel %vm799, %v788, 0
        %v830 = vsel %vm799, %v792, 0
        %832 = vmatpush.xpose.msra.mxu0 0.0
        %833 = vmatpush.xpose.msra.mxu0 0.0
        %834 = vmatpush.xpose.msra.mxu0 0.0
        %835 = vmatpush.xpose.msra.mxu0 0.0
        %836 = vmatpush.xpose.msra.mxu0 0.0
        %837 = vmatpush.xpose.msra.mxu0 0.0
        %838 = vmatpush.xpose.msra.mxu0 0.0
        %839 = vmatpush.xpose.msra.mxu0 0.0
        %840 = vmatpush.xpose.msra.mxu0 0.0
        %841 = vmatpush.xpose.msra.mxu0 0.0
        %842 = vmatpush.xpose.msra.mxu0 0.0
        %843 = vmatpush.xpose.msra.mxu0 0.0
        %844 = vmatpush.xpose.msra.mxu0 0.0
        %845 = vmatpush.xpose.msra.mxu0 0.0
        %846 = vmatpush.xpose.msra.mxu0 0.0
        %847 = vmatpush.xpose.msra.mxu0 %v830
        %848 = vmatmul.f32.gmra.mxu0 %v827
        %v849 = vpop.f32.mrf.mxu0
        %v850 = vadd.f32 0.0, %v849
        %851 = vdwg.mxu0
        %v853 = vsel %vm799, %v789, 0
        %v856 = vsel %vm799, %v793, 0
        %858 = vmatpush.xpose.msra.mxu0 0.0
        %859 = vmatpush.xpose.msra.mxu0 0.0
        %860 = vmatpush.xpose.msra.mxu0 0.0
        %861 = vmatpush.xpose.msra.mxu0 0.0
        %862 = vmatpush.xpose.msra.mxu0 0.0
        %863 = vmatpush.xpose.msra.mxu0 0.0
        %864 = vmatpush.xpose.msra.mxu0 0.0
        %865 = vmatpush.xpose.msra.mxu0 0.0
        %866 = vmatpush.xpose.msra.mxu0 0.0
        %867 = vmatpush.xpose.msra.mxu0 0.0
        %868 = vmatpush.xpose.msra.mxu0 0.0
        %869 = vmatpush.xpose.msra.mxu0 0.0
        %870 = vmatpush.xpose.msra.mxu0 0.0
        %871 = vmatpush.xpose.msra.mxu0 0.0
        %872 = vmatpush.xpose.msra.mxu0 0.0
        %873 = vmatpush.xpose.msra.mxu0 %v856
        %874 = vmatmul.f32.gmra.mxu0 %v853
        %v875 = vpop.f32.mrf.mxu0
        %v876 = vadd.f32 0.0, %v875
        %877 = vdwg.mxu0
        %v879 = vsel %vm799, %v790, 0
        %v882 = vsel %vm799, %v794, 0
        %884 = vmatpush.xpose.msra.mxu0 0.0
        %885 = vmatpush.xpose.msra.mxu0 0.0
        %886 = vmatpush.xpose.msra.mxu0 0.0
        %887 = vmatpush.xpose.msra.mxu0 0.0
        %888 = vmatpush.xpose.msra.mxu0 0.0
        %889 = vmatpush.xpose.msra.mxu0 0.0
        %890 = vmatpush.xpose.msra.mxu0 0.0
        %891 = vmatpush.xpose.msra.mxu0 0.0
        %892 = vmatpush.xpose.msra.mxu0 0.0
        %893 = vmatpush.xpose.msra.mxu0 0.0
        %894 = vmatpush.xpose.msra.mxu0 0.0
        %895 = vmatpush.xpose.msra.mxu0 0.0
        %896 = vmatpush.xpose.msra.mxu0 0.0
        %897 = vmatpush.xpose.msra.mxu0 0.0
        %898 = vmatpush.xpose.msra.mxu0 0.0
        %899 = vmatpush.xpose.msra.mxu0 %v882
        %900 = vmatmul.f32.gmra.mxu0 %v879
        %v901 = vpop.f32.mrf.mxu0
        %v902 = vadd.f32 0.0, %v901
        %903 = vdwg.mxu0
        %v904 = vsel %vm799, %v824, -inf
        %905 = vmax.xlane.f32.xlu0 %v904
        %v906 = vpop.xlane.xlu0 %905
        %v907 = vsel %vm799, %v850, -inf
        %908 = vmax.xlane.f32.xlu0 %v907
        %v909 = vpop.xlane.xlu0 %908
        %v910 = vsel %vm799, %v876, -inf
        %911 = vmax.xlane.f32.xlu0 %v910
        %v912 = vpop.xlane.xlu0 %911
        %v913 = vsel %vm799, %v902, -inf
        %914 = vmax.xlane.f32.xlu0 %v913
        %v915 = vpop.xlane.xlu0 %914
        %v916 = vsub.f32 -inf, %v906
        %v917 = vsub.f32 -inf, %v909
        %v918 = vsub.f32 -inf, %v912
        %v919 = vsub.f32 -inf, %v915
        %v920 = vmul.f32 %v916, 1.442695
        %v921 = vpow.pop %v920
        %v922 = vmul.f32 %v917, 1.442695
        %v923 = vpow.pop %v922
        %v924 = vmul.f32 %v918, 1.442695
        %v925 = vpow.pop %v924
        %v926 = vmul.f32 %v919, 1.442695
        %v927 = vpow.pop %v926
        %v928 = vsub.f32 %v824, %v906
        %v929 = vsub.f32 %v850, %v909
        %v930 = vsub.f32 %v876, %v912
        %v931 = vsub.f32 %v902, %v915
        %v932 = vmul.f32 %v928, 1.442695
        %v933 = vpow.pop %v932
        %v934 = vmul.f32 %v929, 1.442695
        %v935 = vpow.pop %v934
        %v936 = vmul.f32 %v930, 1.442695
        %v937 = vpow.pop %v936
        %v938 = vmul.f32 %v931, 1.442695
        %v939 = vpow.pop %v938
        %v940 = vmul.f32 %v921, 0.0
        %v941 = vmul.f32 %v923, 0.0
        %v942 = vmul.f32 %v925, 0.0
        %v943 = vmul.f32 %v927, 0.0
        %v944 = vsel %vm799, %v933, 0.0
        %945 = vadd.xlane.f32.xlu0 %v944
        %v946 = vpop.xlane.xlu0 %945
        %v947 = vsel %vm799, %v935, 0.0
        %948 = vadd.xlane.f32.xlu0 %v947
        %v949 = vpop.xlane.xlu0 %948
        %v950 = vsel %vm799, %v937, 0.0
        %951 = vadd.xlane.f32.xlu0 %v950
        %v952 = vpop.xlane.xlu0 %951
        %v953 = vsel %vm799, %v939, 0.0
        %954 = vadd.xlane.f32.xlu0 %v953
        %v955 = vpop.xlane.xlu0 %954
        %v956 = vadd.f32 %v940, %v946
        %v957 = vadd.f32 %v941, %v949
        %v958 = vadd.f32 %v942, %v952
        %v959 = vadd.f32 %v943, %v955
        %v961 = vsel %vm799, %v933, 0
        %963 = vmatpush.msra.mxu0 0.0
        %964 = vmatpush.msra.mxu0 0.0
        %965 = vmatpush.msra.mxu0 0.0
        %966 = vmatpush.msra.mxu0 0.0
        %967 = vmatpush.msra.mxu0 0.0
        %968 = vmatpush.msra.mxu0 0.0
        %969 = vmatpush.msra.mxu0 0.0
        %970 = vmatpush.msra.mxu0 0.0
        %971 = vmatpush.msra.mxu0 0.0
        %972 = vmatpush.msra.mxu0 0.0
        %973 = vmatpush.msra.mxu0 0.0
        %974 = vmatpush.msra.mxu0 0.0
        %975 = vmatpush.msra.mxu0 0.0
        %976 = vmatpush.msra.mxu0 0.0
        %977 = vmatpush.msra.mxu0 0.0
        %978 = vmatpush.msra.mxu0 %v795
        %979 = vmatmul.f32.gmra.mxu0 %v961
        %v980 = vpop.f32.mrf.mxu0
        %v981 = vadd.f32 0.0, %v980
        %982 = vdwg.mxu0
        %v984 = vsel %vm799, %v935, 0
        %986 = vmatpush.msra.mxu0 0.0
        %987 = vmatpush.msra.mxu0 0.0
        %988 = vmatpush.msra.mxu0 0.0
        %989 = vmatpush.msra.mxu0 0.0
        %990 = vmatpush.msra.mxu0 0.0
        %991 = vmatpush.msra.mxu0 0.0
        %992 = vmatpush.msra.mxu0 0.0
        %993 = vmatpush.msra.mxu0 0.0
        %994 = vmatpush.msra.mxu0 0.0
        %995 = vmatpush.msra.mxu0 0.0
        %996 = vmatpush.msra.mxu0 0.0
        %997 = vmatpush.msra.mxu0 0.0
        %998 = vmatpush.msra.mxu0 0.0
        %999 = vmatpush.msra.mxu0 0.0
        %1000 = vmatpush.msra.mxu0 0.0
        %1001 = vmatpush.msra.mxu0 %v796
        %1002 = vmatmul.f32.gmra.mxu0 %v984
        %v1003 = vpop.f32.mrf.mxu0
        %v1004 = vadd.f32 0.0, %v1003
        %1005 = vdwg.mxu0
        %v1007 = vsel %vm799, %v937, 0
        %1009 = vmatpush.msra.mxu0 0.0
        %1010 = vmatpush.msra.mxu0 0.0
        %1011 = vmatpush.msra.mxu0 0.0
        %1012 = vmatpush.msra.mxu0 0.0
        %1013 = vmatpush.msra.mxu0 0.0
        %1014 = vmatpush.msra.mxu0 0.0
        %1015 = vmatpush.msra.mxu0 0.0
        %1016 = vmatpush.msra.mxu0 0.0
        %1017 = vmatpush.msra.mxu0 0.0
        %1018 = vmatpush.msra.mxu0 0.0
        %1019 = vmatpush.msra.mxu0 0.0
        %1020 = vmatpush.msra.mxu0 0.0
        %1021 = vmatpush.msra.mxu0 0.0
        %1022 = vmatpush.msra.mxu0 0.0
        %1023 = vmatpush.msra.mxu0 0.0
        %1024 = vmatpush.msra.mxu0 %v797
        %1025 = vmatmul.f32.gmra.mxu0 %v1007
        %v1026 = vpop.f32.mrf.mxu0
        %v1027 = vadd.f32 0.0, %v1026
        %1028 = vdwg.mxu0
        %v1030 = vsel %vm799, %v939, 0
        %1032 = vmatpush.msra.mxu0 0.0
        %1033 = vmatpush.msra.mxu0 0.0
        %1034 = vmatpush.msra.mxu0 0.0
        %1035 = vmatpush.msra.mxu0 0.0
        %1036 = vmatpush.msra.mxu0 0.0
        %1037 = vmatpush.msra.mxu0 0.0
        %1038 = vmatpush.msra.mxu0 0.0
        %1039 = vmatpush.msra.mxu0 0.0
        %1040 = vmatpush.msra.mxu0 0.0
        %1041 = vmatpush.msra.mxu0 0.0
        %1042 = vmatpush.msra.mxu0 0.0
        %1043 = vmatpush.msra.mxu0 0.0
        %1044 = vmatpush.msra.mxu0 0.0
        %1045 = vmatpush.msra.mxu0 0.0
        %1046 = vmatpush.msra.mxu0 0.0
        %1047 = vmatpush.msra.mxu0 %v798
        %1048 = vmatmul.f32.gmra.mxu0 %v1030
        %v1049 = vpop.f32.mrf.mxu0
        %v1050 = vadd.f32 0.0, %v1049
        %1051 = vdwg.mxu0
        %v1052 = vadd.f32 %v940, %v981
        %v1053 = vadd.f32 %v941, %v1004
        %v1054 = vadd.f32 %v942, %v1027
        %v1055 = vadd.f32 %v943, %v1050
        %v1056 = vrcp.pop %v956
        %v1057 = vmul.f32 %v956, %v1056
        %v1058 = vsub.f32 1.0, %v1057
        %v1059 = vmul.f32 %v1056, %v1058
        %v1060 = vadd.f32 %v1056, %v1059
        %vm1061 = vweird.f32 %v956
        %vm1062 = vweird.f32 %v1056
        %vm1063 = vmor %vm1061, %vm1062
        %v1064 = vsel %vm1063, %v1056, %v1060
        %v1065 = vand.u32 2147483647, %v956
        %vm1066 = vcmp.eq.f32.partialorder %v1065, 8.507059e+37
        %v1067 = vand.u32 %v956, 2147483648
        %v1068 = vor.u32 1.1754944e-38, %v1067
        %v1069 = vsel %vm1066, %v1068, %v1064
        %v1070 = vmul.f32 %v1052, %v1069
        %v1071 = vrcp.pop %v957
        %v1072 = vmul.f32 %v957, %v1071
        %v1073 = vsub.f32 1.0, %v1072
        %v1074 = vmul.f32 %v1071, %v1073
        %v1075 = vadd.f32 %v1071, %v1074
        %vm1076 = vweird.f32 %v957
        %vm1077 = vweird.f32 %v1071
        %vm1078 = vmor %vm1076, %vm1077
        %v1079 = vsel %vm1078, %v1071, %v1075
        %v1080 = vand.u32 2147483647, %v957
        %vm1081 = vcmp.eq.f32.partialorder %v1080, 8.507059e+37
        %v1082 = vand.u32 %v957, 2147483648
        %v1083 = vor.u32 1.1754944e-38, %v1082
        %v1084 = vsel %vm1081, %v1083, %v1079
        %v1085 = vmul.f32 %v1053, %v1084
        %v1086 = vrcp.pop %v958
        %v1087 = vmul.f32 %v958, %v1086
        %v1088 = vsub.f32 1.0, %v1087
        %v1089 = vmul.f32 %v1086, %v1088
        %v1090 = vadd.f32 %v1086, %v1089
        %vm1091 = vweird.f32 %v958
        %vm1092 = vweird.f32 %v1086
        %vm1093 = vmor %vm1091, %vm1092
        %v1094 = vsel %vm1093, %v1086, %v1090
        %v1095 = vand.u32 2147483647, %v958
        %vm1096 = vcmp.eq.f32.partialorder %v1095, 8.507059e+37
        %v1097 = vand.u32 %v958, 2147483648
        %v1098 = vor.u32 1.1754944e-38, %v1097
        %v1099 = vsel %vm1096, %v1098, %v1094
        %v1100 = vmul.f32 %v1054, %v1099
        %v1101 = vrcp.pop %v959
        %v1102 = vmul.f32 %v959, %v1101
        %v1103 = vsub.f32 1.0, %v1102
        %v1104 = vmul.f32 %v1101, %v1103
        %v1105 = vadd.f32 %v1101, %v1104
        %vm1106 = vweird.f32 %v959
        %vm1107 = vweird.f32 %v1101
        %vm1108 = vmor %vm1106, %vm1107
        %v1109 = vsel %vm1108, %v1101, %v1105
        %v1110 = vand.u32 2147483647, %v959
        %vm1111 = vcmp.eq.f32.partialorder %v1110, 8.507059e+37
        %v1112 = vand.u32 %v959, 2147483648
        %v1113 = vor.u32 1.1754944e-38, %v1112
        %v1114 = vsel %vm1111, %v1113, %v1109
        %v1115 = vmul.f32 %v1055, %v1114
        %1117 = vrot.lane.b32.xlu0 %v1085, 8
        %v1118 = vpop.permute.xlu0 %1117
        %1121 = vrot.lane.b32.xlu0 %v1100, 16
        %v1122 = vpop.permute.xlu0 %1121
        %1125 = vrot.lane.b32.xlu0 %v1115, 24
        %v1126 = vpop.permute.xlu0 %1125
        %v1128 = vsel %vm799, %v1070, %v1118
        %vm1129 = vcmask 130048
        %v1130 = vsel %vm1129, %v1128, %v1122
        %vm1131 = vcmask 195584
        %v1132 = vsel %vm1131, %v1130, %v1126
        %v1133 = vld [vmem:[%s8] sm:$0xff]
        %v1134 = vld [vmem:[%s8 + $0x8] sm:$0xff]
        %v1135 = vld [vmem:[%s8 + $0x10] sm:$0xff]
        %v1136 = vld [vmem:[%s8 + $0x18] sm:$0xff]
        %v1137 = vld [vmem:[%s9] sm:$0x1]
        %v1139 = vperm.slane %v1137, 0
        %v1142 = vsel %vm702, %v1132, 0
        %1144 = vmatpush.msra.mxu0 0.0
        %1145 = vmatpush.msra.mxu0 0.0
        %1146 = vmatpush.msra.mxu0 0.0
        %1147 = vmatpush.msra.mxu0 0.0
        %1148 = vmatpush.msra.mxu0 0.0
        %1149 = vmatpush.msra.mxu0 0.0
        %1150 = vmatpush.msra.mxu0 0.0
        %1151 = vmatpush.msra.mxu0 0.0
        %1152 = vmatpush.msra.mxu0 0.0
        %1153 = vmatpush.msra.mxu0 0.0
        %1154 = vmatpush.msra.mxu0 0.0
        %1155 = vmatpush.msra.mxu0 0.0
        %1156 = vmatpush.msra.mxu0 %v1136
        %1157 = vmatpush.msra.mxu0 %v1135
        %1158 = vmatpush.msra.mxu0 %v1134
        %1159 = vmatpush.msra.mxu0 %v1133
        %1160 = vmatmul.f32.gmra.mxu0 %v1142
        %v1161 = vpop.f32.mrf.mxu0
        %v1162 = vadd.f32 %v1139, %v1161
        %1163 = vdwg.mxu0
        %v1164 = vadd.f32 %v699, %v1162
        %v1165 = vld [vmem:[%s10] sm:$0x1]
        %v1166 = vld [vmem:[%s11] sm:$0x1]
        %v1167 = vsel %vm702, %v1164, 0.0
        %1168 = vadd.xlane.f32.xlu0 %v1167
        %v1169 = vpop.xlane.xlu0 %1168
        %v1170 = vmul.f32 %v1169, %v712
        %v1171 = vsub.f32 %v1164, %v1170
        %v1172 = vmul.f32 %v1171, %v1171
        %v1173 = vsel %vm702, %v1172, 0.0
        %1174 = vadd.xlane.f32.xlu0 %v1173
        %v1175 = vpop.xlane.xlu0 %1174
        %v1176 = vmul.f32 %v1175, %v712
        %v1177 = vadd.f32 %v1176, 1e-05
        %v1178 = vrsqrt.pop %v1177
        %v1179 = vmul.f32 %v1178, %v1177
        %v1180 = vmul.f32 %v1179, %v1178
        %v1181 = vmul.f32 0.5, %v1180
        %v1182 = vsub.f32 1.5, %v1181
        %v1183 = vmul.f32 %v1178, %v1182
        %vm1184 = vweird.f32 %v1177
        %vm1185 = vweird.f32 %v1178
        %vm1186 = vmor %vm1184, %vm1185
        %v1187 = vsel %vm1186, %v1178, %v1183
        %v1188 = vmul.f32 %v1171, %v1187
        %v1190 = vperm.slane %v1165, 0
        %v1192 = vmul.f32 %v1188, %v1190
        %v1194 = vperm.slane %v1166, 0
        %v1196 = vadd.f32 %v1192, %v1194
        %v1197 = vld [vmem:[%s12] sm:$0xff]
        %v1198 = vld [vmem:[%s12 + $0x8] sm:$0xff]
        %v1199 = vld [vmem:[%s12 + $0x10] sm:$0xff]
        %v1200 = vld [vmem:[%s12 + $0x18] sm:$0xff]
        %v1201 = vld [vmem:[%s13] sm:$0x1]
        %v1203 = vperm.slane %v1201, 0
        %v1206 = vsel %vm702, %v1196, 0
        %1208 = vmatpush.msra.mxu0 0.0
        %1209 = vmatpush.msra.mxu0 0.0
        %1210 = vmatpush.msra.mxu0 0.0
        %1211 = vmatpush.msra.mxu0 0.0
        %1212 = vmatpush.msra.mxu0 0.0
        %1213 = vmatpush.msra.mxu0 0.0
        %1214 = vmatpush.msra.mxu0 0.0
        %1215 = vmatpush.msra.mxu0 0.0
        %1216 = vmatpush.msra.mxu0 0.0
        %1217 = vmatpush.msra.mxu0 0.0
        %1218 = vmatpush.msra.mxu0 0.0
        %1219 = vmatpush.msra.mxu0 0.0
        %1220 = vmatpush.msra.mxu0 %v1200
        %1221 = vmatpush.msra.mxu0 %v1199
        %1222 = vmatpush.msra.mxu0 %v1198
        %1223 = vmatpush.msra.mxu0 %v1197
        %1224 = vmatmul.f32.gmra.mxu0 %v1206
        %v1225 = vpop.f32.mrf.mxu0
        %v1226 = vadd.f32 %v1203, %v1225
        %1227 = vdwg.mxu0
        %v1228 = vmul.f32 %v1226, 0.5
        %v1229 = vmul.f32 %v1226, 0.70710677
        %v1230 = vmul.f32 %v1229, %v1229
        %v1231 = vmin.f32 16.0, %v1230
        %v1232 = vmul.f32 %v1231, 2.1237322e-06
        %v1233 = vadd.f32 %v1232, 0.00028619796
        %v1234 = vmul.f32 %v1231, %v1233
        %v1235 = vadd.f32 %v1234, 0.0036580483
        %v1236 = vmul.f32 %v1231, %v1235
        %v1237 = vadd.f32 %v1236, 0.05243302
        %v1238 = vmul.f32 %v1231, %v1237
        %v1239 = vadd.f32 %v1238, 0.18741608
        %v1240 = vmul.f32 %v1231, %v1239
        %v1241 = vadd.f32 %v1240, 1.1283791
        %v1242 = vmul.f32 %v1229, %v1241
        %v1243 = vmul.f32 %v1231, 3.8918573e-05
        %v1244 = vadd.f32 %v1243, 0.001143296
        %v1245 = vmul.f32 %v1231, %v1244
        %v1246 = vadd.f32 %v1245, 0.014752088
        %v1247 = vmul.f32 %v1231, %v1246
        %v1248 = vadd.f32 %v1247, 0.112945676
        %v1249 = vmul.f32 %v1231, %v1248
        %v1250 = vadd.f32 %v1249, 0.4994258
        %v1251 = vmul.f32 %v1231, %v1250
        %v1252 = vadd.f32 %v1251, 1.0
        %v1253 = vrcp.pop %v1252
        %v1254 = vmul.f32 %v1252, %v1253
        %v1255 = vsub.f32 1.0, %v1254
        %v1256 = vmul.f32 %v1253, %v1255
        %v1257 = vadd.f32 %v1253, %v1256
        %vm1258 = vweird.f32 %v1252
        %vm1259 = vweird.f32 %v1253
        %vm1260 = vmor %vm1258, %vm1259
        %v1261 = vsel %vm1260, %v1253, %v1257
        %v1262 = vand.u32 2147483647, %v1252
        %vm1263 = vcmp.eq.f32.partialorder %v1262, 8.507059e+37
        %v1264 = vand.u32 %v1252, 2147483648
        %v1265 = vor.u32 1.1754944e-38, %v1264
        %v1266 = vsel %vm1263, %v1265, %v1261
        %v1267 = vmul.f32 %v1242, %v1266
        %v1268 = vmin.f32 %v1267, 1.0
        %v1269 = vmax.f32 %v1268, -1.0
        %v1270 = vadd.f32 %v1269, 1.0
        %v1271 = vmul.f32 %v1228, %v1270
        %v1272 = vld [vmem:[%s14] sm:$0xff]
        %v1273 = vld [vmem:[%s14 + $0x8] sm:$0xff]
        %v1274 = vld [vmem:[%s14 + $0x10] sm:$0xff]
        %v1275 = vld [vmem:[%s14 + $0x18] sm:$0xff]
        %v1276 = vld [vmem:[%s14 + $0x20] sm:$0xff]
        %v1277 = vld [vmem:[%s14 + $0x28] sm:$0xff]
        %v1278 = vld [vmem:[%s14 + $0x30] sm:$0xff]
        %v1279 = vld [vmem:[%s14 + $0x38] sm:$0xff]
        %v1280 = vld [vmem:[%s14 + $0x40] sm:$0xff]
        %v1281 = vld [vmem:[%s14 + $0x48] sm:$0xff]
        %v1282 = vld [vmem:[%s14 + $0x50] sm:$0xff]
        %v1283 = vld [vmem:[%s14 + $0x58] sm:$0xff]
        %v1284 = vld [vmem:[%s14 + $0x60] sm:$0xff]
        %v1285 = vld [vmem:[%s14 + $0x68] sm:$0xff]
        %v1286 = vld [vmem:[%s14 + $0x70] sm:$0xff]
        %v1287 = vld [vmem:[%s14 + $0x78] sm:$0xff]
        %v1288 = vld [vmem:[%s15] sm:$0x1]
        %v1290 = vperm.slane %v1288, 0
        %1292 = vmatpush.msra.mxu0 %v1287
        %1293 = vmatpush.msra.mxu0 %v1286
        %1294 = vmatpush.msra.mxu0 %v1285
        %1295 = vmatpush.msra.mxu0 %v1284
        %1296 = vmatpush.msra.mxu0 %v1283
        %1297 = vmatpush.msra.mxu0 %v1282
        %1298 = vmatpush.msra.mxu0 %v1281
        %1299 = vmatpush.msra.mxu0 %v1280
        %1300 = vmatpush.msra.mxu0 %v1279
        %1301 = vmatpush.msra.mxu0 %v1278
        %1302 = vmatpush.msra.mxu0 %v1277
        %1303 = vmatpush.msra.mxu0 %v1276
        %1304 = vmatpush.msra.mxu0 %v1275
        %1305 = vmatpush.msra.mxu0 %v1274
        %1306 = vmatpush.msra.mxu0 %v1273
        %1307 = vmatpush.msra.mxu0 %v1272
        %1308 = vmatmul.f32.gmra.mxu0 %v1271
        %v1309 = vpop.f32.mrf.mxu0
        %v1310 = vadd.f32 %v1290, %v1309
        %1311 = vdwg.mxu0
        %v1312 = vadd.f32 %v1164, %v1310
        %v1313 = vld [vmem:[%s16] sm:$0x1]
        %v1314 = vld [vmem:[%s17] sm:$0x1]
        %v1315 = vsel %vm702, %v1312, 0.0
        %1316 = vadd.xlane.f32.xlu0 %v1315
        %v1317 = vpop.xlane.xlu0 %1316
        %v1318 = vmul.f32 %v1317, %v712
        %v1319 = vsub.f32 %v1312, %v1318
        %v1320 = vmul.f32 %v1319, %v1319
        %v1321 = vsel %vm702, %v1320, 0.0
        %1322 = vadd.xlane.f32.xlu0 %v1321
        %v1323 = vpop.xlane.xlu0 %1322
        %v1324 = vmul.f32 %v1323, %v712
        %v1325 = vadd.f32 %v1324, 1e-05
        %v1326 = vrsqrt.pop %v1325
        %v1327 = vmul.f32 %v1326, %v1325
        %v1328 = vmul.f32 %v1327, %v1326
        %v1329 = vmul.f32 0.5, %v1328
        %v1330 = vsub.f32 1.5, %v1329
        %v1331 = vmul.f32 %v1326, %v1330
        %vm1332 = vweird.f32 %v1325
        %vm1333 = vweird.f32 %v1326
        %vm1334 = vmor %vm1332, %vm1333
        %v1335 = vsel %vm1334, %v1326, %v1331
        %v1336 = vmul.f32 %v1319, %v1335
        %v1338 = vperm.slane %v1313, 0
        %v1340 = vmul.f32 %v1336, %v1338
        %v1342 = vperm.slane %v1314, 0
        %v1344 = vadd.f32 %v1340, %v1342
        %1345 = vst.msk [vmem:[%s580] sm:$0xff] %vm702, %v1344
        %s1346 = sand.u32 %s437, 1
        %s1347 = scalar_lea.sflag [#allocation5], %s1346
        %s1348 = sand.u32 %s437, 1
        %s1349 = smul.addr %s1348, 8
        %s1350 = scalar_lea.vmem [#allocation4], %s1349
        // Predicated region
        $region97: #{tpu_custom_call.1} parent=91 // pred_check
          %p1351 = pneg %p447
        $region98: #{tpu_custom_call.1} parent=91 // pred_check_branch
          %1353 = sbr.rel (%p1351) target = $region100
        $region99: #{tpu_custom_call.1} parent=91 // pred_region
          %1355 = vsyncadd %s1347, 0
          %s1356 = sadd.s32 %s37, %s36
          %s1357 = smul.addr %s1356, 8
          %s1358 = scalar_lea.hbm %s18, %s1357
          %s1360 = sshll.u32 %s1350, 4
          %s1361 = int_to_ptr.vmem [resolvable:$true] %s1360
          %s1362 = sshll.u32 %s1358, 4
          %s1363 = int_to_ptr.hbm [resolvable:$true] %s1362
          %1365 = dma.vmem_to_hbm [thread:$0]  %s1361, 128, %s1363, %s1347
        $region100: #{tpu_custom_call.1} parent=91 // pred_fallthru
          _
      $region92: #{tpu_custom_call.1} parent=5 // pred_fallthru
        _
      %p1366 = scmp.le.s32.totalorder 2, %s27
      // Predicated region
      $region101: #{tpu_custom_call.1} parent=5 // pred_check
        %p1367 = pneg %p1366
      $region102: #{tpu_custom_call.1} parent=5 // pred_check_branch
        %1369 = sbr.rel (%p1367) target = $region104
      $region103: #{tpu_custom_call.1} parent=5 // pred_region
        %s1370 = ssub.s32 %s27, 2
        // Predicated region
        $region105: #{tpu_custom_call.1} parent=103 // pred_check
          %p1371 = pneg %p453
        $region106: #{tpu_custom_call.1} parent=103 // pred_check_branch
          %1373 = sbr.rel (%p1371) target = $region108
        $region107: #{tpu_custom_call.1} parent=103 // pred_region
          %s1374 = sand.u32 %s438, 1
          %s1375 = scalar_lea.sflag [#allocation5], %s1374
          %s1376 = sand.u32 %s438, 1
          %s1377 = smul.addr %s1376, 8
          %s1378 = scalar_lea.vmem [#allocation4], %s1377
          %1380 = dma.done %s1375, 128
        $region108: #{tpu_custom_call.1} parent=103 // pred_fallthru
          _
      $region104: #{tpu_custom_call.1} parent=5 // pred_fallthru
        _
    $region6: #{tpu_custom_call.1} parent=1 // loop_footer
      %s31 = sadd.s32 1, %s27
    $region7: #{tpu_custom_call.1} parent=1 // loop_footer_branch
      %26 = sbr.rel target = $region3
    $region8: #{tpu_custom_call.1} parent=1 // loop_exit
      _
    %1381 = vsyncpa [#allocation5], 1
    %s1382 = scalar_lea.sflag [#allocation5], 1
    %1383 = vsyncpa %s1382, 1

</llo_original>
